<compile_context>
chip_gen: v7x
topology: tpu7x:2x2x1
jax: 0.10.0
libtpu: 0.0.40
codegen_flags: <defaults>
</compile_context>

<pallas_src>
import functools
from typing import NamedTuple

import numpy as np
import jax
import jax.numpy as jnp
from jax.experimental import pallas as pl
from jax.experimental.pallas import tpu as pltpu

_SQRT_2_OVER_PI = 0.7978845608028654


# ----------------------------------------------------------------------------
# Kernels
# ----------------------------------------------------------------------------
def _mlp_chunk(x_ref, wgu_ref, wd_ref):
    """One I-chunk of gelu_tanh(x@Wg) * (x@Wu) @ Wd, f32 partial result."""
    x = x_ref[...]                                             # (tile_m, H) bf16
    # Fused gate|up projection: single MXU matmul per step.
    gu = jnp.dot(x, wgu_ref[...], preferred_element_type=jnp.float32)
    ti = wd_ref.shape[0]
    gate = gu[:, :ti]
    up = gu[:, ti:]
    # tanh-GELU (PyTorch "gelu_pytorch_tanh"); elementwise math kept in f32.
    inner = _SQRT_2_OVER_PI * (gate + 0.044715 * gate * gate * gate)
    act = 0.5 * gate * (1.0 + jnp.tanh(inner))
    h = (act * up).astype(wd_ref.dtype)                        # bf16 for the MXU
    return jnp.dot(h, wd_ref[...], preferred_element_type=jnp.float32)


def _kernel_f32_out(x_ref, wgu_ref, wd_ref, o_ref):
    """f32 output: the resident output block is the accumulator (no scratch)."""
    @pl.when(pl.program_id(1) == 0)
    def _():
        o_ref[...] = jnp.zeros_like(o_ref)

    o_ref[...] += _mlp_chunk(x_ref, wgu_ref, wd_ref)


def _kernel_cast_out(x_ref, wgu_ref, wd_ref, o_ref, acc_ref):
    """Non-f32 output: accumulate in f32 scratch, cast + store on the last chunk."""
    k = pl.program_id(1)

    @pl.when(k == 0)
    def _():
        acc_ref[...] = jnp.zeros_like(acc_ref)

    acc_ref[...] += _mlp_chunk(x_ref, wgu_ref, wd_ref)

    @pl.when(k == pl.num_programs(1) - 1)
    def _():
        o_ref[...] = acc_ref[...].astype(o_ref.dtype)


# ----------------------------------------------------------------------------
# Tiling / VMEM heuristics
# ----------------------------------------------------------------------------
def _round_up(x, m):
    return ((x + m - 1) // m) * m


def _vmem_budget_bytes():
    """~75% of physical VMEM: 96 MiB on v5e/v6e (128 MiB), 48 MiB on v7x (64 MiB)."""
    try:
        cap = int(pltpu.get_tpu_info().vmem_capacity_bytes)
    except Exception:
        cap = 64 * 1024 * 1024  # conservative fallback, safe on every generation
    return (cap * 3) // 4


def _estimate_vmem_bytes(tile_m, tile_i, H, out_itemsize, f32_out):
    bf16 = 2
    need = 2 * tile_m * H * bf16                 # x tile, double buffered
    need += 2 * H * (2 * tile_i) * bf16          # fused gate|up block, double buffered
    need += 2 * tile_i * H * bf16                # down block, double buffered
    need += 2 * tile_m * H * out_itemsize        # output block, double buffered
    if not f32_out:
        need += tile_m * H * 4                   # f32 accumulator scratch
    need += 24 * tile_m * tile_i                 # f32 intermediates (gu/gate/up/act/h)
    return need


def _pick_tile_i(H, I, budget):
    """Largest multiple-of-128 divisor of I (<=1024) whose double-buffered
    bf16 weight blocks use <= ~45% of the VMEM budget."""
    best = None
    for ti in range(128, min(I, 1024) + 1, 128):
        if I % ti:
            continue
        w_bytes = 2 * (H * 2 * ti + ti * H) * 2
        if w_bytes <= 0.45 * budget:
            best = ti
    if best is not None:
        return best
    for ti in range(128, I + 1, 128):
        if I % ti == 0:
            return ti
    return I  # last resort (I not a multiple of 128): single full-I chunk


def _pick_tile_m(M, H, tile_i, budget, out_itemsize, f32_out):
    cap = 1024 if budget >= 72 * 1024 * 1024 else 512   # bigger row tiles on 128-MiB chips
    tm = _round_up(max(min(M, cap), 128), 128)
    while tm > 128 and _estimate_vmem_bytes(tm, tile_i, H, out_itemsize, f32_out) > budget:
        tm -= 128
    # Keep >= 2 row tiles when M allows so v7x's two TensorCores both get work.
    if M > 128 and pl.cdiv(M, tm) < 2:
        tm = _round_up(pl.cdiv(M, 2), 128)
    return max(tm, 128)


# ----------------------------------------------------------------------------
# Weight preparation (done once; hoisted out of the forward path)
# ----------------------------------------------------------------------------
class PreparedMLPWeights(NamedTuple):
    wgu: jax.Array      # (nI, H, 2*tile_i) bf16 — contiguous fused gate|up chunks
    wd: jax.Array       # (nI, tile_i, H)   bf16 — contiguous down_proj chunks
    tile_i: int
    hidden: int
    inter: int


def prepare_gemma_mlp_weights(wg, wu, wd, vmem_budget=None):
    """Cast to bf16, fuse gate|up, and pre-block so every streamed chunk is
    contiguous in HBM. Call once; reuse across forward calls."""
    H, I = wg.shape
    if vmem_budget is None:
        vmem_budget = _vmem_budget_bytes()
    tile_i = _pick_tile_i(H, I, vmem_budget)
    nI = I // tile_i
    wg_b = wg.astype(jnp.bfloat16).reshape(H, nI, tile_i).transpose(1, 0, 2)
    wu_b = wu.astype(jnp.bfloat16).reshape(H, nI, tile_i).transpose(1, 0, 2)
    wgu = jnp.concatenate([wg_b, wu_b], axis=-1)              # (nI, H, 2*tile_i)
    wd_b = wd.astype(jnp.bfloat16).reshape(nI, tile_i, H)     # (nI, tile_i, H)
    return PreparedMLPWeights(wgu, wd_b, tile_i, H, I)


# ----------------------------------------------------------------------------
# pallas_call wrapper
# ----------------------------------------------------------------------------
@functools.partial(jax.jit,
                   static_argnames=("tile_m", "tile_i", "out_dtype", "vmem_limit"))
def _gemma_mlp_pallas(x2d, wgu, wdb, *, tile_m, tile_i, out_dtype, vmem_limit):
    M, H = x2d.shape
    nI = wgu.shape[0]
    I = nI * tile_i
    grid = (M // tile_m, nI)

    f32_out = np.dtype(out_dtype) == np.dtype(np.float32)
    kernel = _kernel_f32_out if f32_out else _kernel_cast_out
    scratch = [] if f32_out else [pltpu.VMEM((tile_m, H), jnp.float32)]

    cost = pl.CostEstimate(
        flops=6 * M * H * I,
        transcendentals=M * I,
        bytes_accessed=(x2d.size * x2d.dtype.itemsize
                        + wgu.size * wgu.dtype.itemsize
                        + wdb.size * wdb.dtype.itemsize
                        + M * H * np.dtype(out_dtype).itemsize),
    )

    return pl.pallas_call(
        kernel,
        out_shape=jax.ShapeDtypeStruct((M, H), out_dtype),
        grid=grid,
        in_specs=[
            pl.BlockSpec((tile_m, H), lambda i, k: (i, 0)),          # x row tile
            pl.BlockSpec((None, H, 2 * tile_i), lambda i, k: (k, 0, 0)),  # gate|up chunk
            pl.BlockSpec((None, tile_i, H), lambda i, k: (k, 0, 0)),      # down chunk
        ],
        out_specs=pl.BlockSpec((tile_m, H), lambda i, k: (i, 0)),
        scratch_shapes=scratch,
        compiler_params=pltpu.CompilerParams(
            dimension_semantics=("parallel", "arbitrary"),
            vmem_limit_bytes=int(vmem_limit)),
        cost_estimate=cost,
    )(x2d, wgu, wdb)


# ----------------------------------------------------------------------------
# StreamMLP.forward
# ----------------------------------------------------------------------------
def stream_mlp_forward(x, weights, chunk_range=None, tile_m=None):
    """StreamMLP.forward: optional seq-chunk slice, then Gemma MLP.

    x: [B, S, H] (float32 or bfloat16)
    weights: PreparedMLPWeights (preferred; prepare once) or a (wg, wu, wd)
             tuple of raw [H, I] / [H, I] / [I, H] matrices.
    """
    if not isinstance(weights, PreparedMLPWeights):
        # TODO(synk): cache prepared weights at module init — per-call prep
        # re-reads and casts all three weight matrices.
        weights = prepare_gemma_mlp_weights(*weights)

    if chunk_range is not None:
        x = x[:, chunk_range[0]:chunk_range[1], :]

    B, S, H = x.shape
    assert H == weights.hidden, "hidden size mismatch"
    M = B * S

    out_dtype = x.dtype
    f32_out = np.dtype(out_dtype) == np.dtype(np.float32)
    budget = _vmem_budget_bytes()
    if tile_m is None:
        tile_m = _pick_tile_m(M, H, weights.tile_i, budget,
                              np.dtype(out_dtype).itemsize, f32_out)

    x2d = x.reshape(M, H).astype(jnp.bfloat16)
    m_pad = _round_up(M, tile_m)
    if m_pad != M:  # ragged tail from chunk_range: zero rows are exact no-ops
        x2d = jnp.pad(x2d, ((0, m_pad - M), (0, 0)))

    out2d = _gemma_mlp_pallas(
        x2d, weights.wgu, weights.wd,
        tile_m=tile_m, tile_i=weights.tile_i,
        out_dtype=out_dtype, vmem_limit=budget)

    if m_pad != M:
        out2d = out2d[:M]
    return out2d.reshape(B, S, H)


# ----------------------------------------------------------------------------
# Reference + demo
# ----------------------------------------------------------------------------
def _reference(x, wg, wu, wd, chunk_range=None):
    if chunk_range is not None:
        x = x[:, chunk_range[0]:chunk_range[1], :]
    gate = x @ wg
    up = x @ wu
    act = 0.5 * gate * (1.0 + jnp.tanh(_SQRT_2_OVER_PI * (gate + 0.044715 * gate ** 3)))
    return (act * up) @ wd


if __name__ == "__main__":
    key = jax.random.PRNGKey(0)
    # Small but lane-dense demo shapes (H, I multiples of 128).
    B, S, H, I = 2, 128, 256, 512

    kx, kg, ku, kd = jax.random.split(key, 4)
    x = jax.random.normal(kx, (B, S, H), dtype=jnp.float32)
    wg = jax.random.normal(kg, (H, I), dtype=jnp.float32) * 0.05
    wu = jax.random.normal(ku, (H, I), dtype=jnp.float32) * 0.05
    wd = jax.random.normal(kd, (I, H), dtype=jnp.float32) * 0.05

    # Weight prep happens once (bf16 cast + fused/blocked layout), then is
    # reused by every forward call.
    prepared = prepare_gemma_mlp_weights(wg, wu, wd)

    # Full-sequence forward (chunk_range=None path).
    out = jax.block_until_ready(stream_mlp_forward(x, prepared))
    ref = _reference(x, wg, wu, wd)
    assert out.shape == ref.shape, "shape mismatch (full)"
    # bf16 MXU operands vs f32 reference -> loosened tolerance.
    assert jnp.allclose(out, ref, atol=5e-2, rtol=5e-2), "mismatch (full)"

    # chunk_range path: M = 2*100 = 200 rows -> exercises the padded ragged tail.
    cr = (3, 103)
    out_c = jax.block_until_ready(stream_mlp_forward(x, prepared, chunk_range=cr))
    ref_c = _reference(x, wg, wu, wd, chunk_range=cr)
    assert out_c.shape == ref_c.shape, "shape mismatch (chunk)"
    assert jnp.allclose(out_c, ref_c, atol=5e-2, rtol=5e-2), "mismatch (chunk)"

    print("KERNEL_OK")
</pallas_src>

<mosaic_0001>
module attributes {stable_mosaic.version = 11 : i64} {
  func.func @_kernel_f32_out(%arg0: i32, %arg1: i32, %arg2: memref<128x256xbf16, #tpu.memory_space<vmem>>, %arg3: memref<1x256x1024xbf16, #tpu.memory_space<vmem>>, %arg4: memref<1x512x256xbf16, #tpu.memory_space<vmem>>, %arg5: memref<128x256xf32, #tpu.memory_space<vmem>>) attributes {dimension_semantics = [#tpu.dimension_semantics<parallel>, #tpu.dimension_semantics<arbitrary>], iteration_bounds = array<i64: 2, 1>, scalar_prefetch = 0 : i64, scratch_operands = 0 : i64, tpu.core_type = #tpu.core_type<tc>, window_params = [{transform_indices = @transform_0, window_bounds = array<i64: 128, 256>}, {transform_indices = @transform_1, window_bounds = array<i64: 1, 256, 1024>}, {transform_indices = @transform_2, window_bounds = array<i64: 1, 512, 256>}, {transform_indices = @transform_3, window_bounds = array<i64: 128, 256>}]} {
    %c0_i32 = arith.constant 0 : i32
    %0 = arith.cmpi eq, %arg1, %c0_i32 : i32
    %1 = arith.extui %0 : i1 to i32
    %c0_i32_0 = arith.constant 0 : i32
    %2 = arith.cmpi ne, %1, %c0_i32_0 : i32
    scf.if %2 {
      %cst_17 = arith.constant 0.000000e+00 : f32
      %30 = vector.broadcast %cst_17 : f32 to vector<128x256xf32>
      %c0_18 = arith.constant 0 : index
      %c0_19 = arith.constant 0 : index
      %31 = vector.load %arg5[%c0_18, %c0_19] : memref<128x256xf32, #tpu.memory_space<vmem>>, vector<128x256xf32>
      tpu.vector_store %arg5[%c0_18, %c0_19], %30 {strides = array<i32>} : memref<128x256xf32, #tpu.memory_space<vmem>>, vector<128x256xf32>,
    } else {
    }
    %c0 = arith.constant 0 : index
    %c0_1 = arith.constant 0 : index
    %3 = vector.load %arg5[%c0, %c0_1] : memref<128x256xf32, #tpu.memory_space<vmem>>, vector<128x256xf32>
    %c0_2 = arith.constant 0 : index
    %c0_3 = arith.constant 0 : index
    %4 = vector.load %arg2[%c0_2, %c0_3] : memref<128x256xbf16, #tpu.memory_space<vmem>>, vector<128x256xbf16>
    %c0_4 = arith.constant 0 : index
    %c0_5 = arith.constant 0 : index
    %c0_6 = arith.constant 0 : index
    %5 = vector.load %arg3[%c0_4, %c0_5, %c0_6] : memref<1x256x1024xbf16, #tpu.memory_space<vmem>>, vector<1x256x1024xbf16>
    %6 = vector.shape_cast %5 : vector<1x256x1024xbf16> to vector<256x1024xbf16>
    %cst = arith.constant dense<0.000000e+00> : vector<128x1024xf32>
    %7 = tpu.matmul %4, %6, %cst {dimension_numbers = #tpu.dot_dimension_numbers<[1], [0], [0], [1], [0, 0, 1, 1], [], []>} : vector<128x256xbf16>, vector<256x1024xbf16>, vector<128x1024xf32> -> vector<128x1024xf32>
    %8 = vector.extract_strided_slice %7 {offsets = [0, 0], sizes = [128, 512], strides = [1, 1]} : vector<128x1024xf32> to vector<128x512xf32>
    %9 = vector.extract_strided_slice %7 {offsets = [0, 512], sizes = [128, 512], strides = [1, 1]} : vector<128x1024xf32> to vector<128x512xf32>
    %cst_7 = arith.constant 4.471500e-02 : f32
    %10 = vector.broadcast %cst_7 : f32 to vector<128x512xf32>
    %11 = arith.mulf %10, %8 : vector<128x512xf32>
    %12 = arith.mulf %11, %8 : vector<128x512xf32>
    %13 = arith.mulf %12, %8 : vector<128x512xf32>
    %14 = arith.addf %8, %13 : vector<128x512xf32>
    %cst_8 = arith.constant 0.797884583 : f32
    %15 = vector.broadcast %cst_8 : f32 to vector<128x512xf32>
    %16 = arith.mulf %15, %14 : vector<128x512xf32>
    %cst_9 = arith.constant 5.000000e-01 : f32
    %17 = vector.broadcast %cst_9 : f32 to vector<128x512xf32>
    %18 = arith.mulf %17, %8 : vector<128x512xf32>
    %19 = math.tanh %16 : vector<128x512xf32>
    %cst_10 = arith.constant 1.000000e+00 : f32
    %20 = vector.broadcast %cst_10 : f32 to vector<128x512xf32>
    %21 = arith.addf %20, %19 : vector<128x512xf32>
    %22 = arith.mulf %18, %21 : vector<128x512xf32>
    %23 = arith.mulf %22, %9 : vector<128x512xf32>
    %24 = arith.truncf %23 : vector<128x512xf32> to vector<128x512xbf16>
    %c0_11 = arith.constant 0 : index
    %c0_12 = arith.constant 0 : index
    %c0_13 = arith.constant 0 : index
    %25 = vector.load %arg4[%c0_11, %c0_12, %c0_13] : memref<1x512x256xbf16, #tpu.memory_space<vmem>>, vector<1x512x256xbf16>
    %26 = vector.shape_cast %25 : vector<1x512x256xbf16> to vector<512x256xbf16>
    %cst_14 = arith.constant dense<0.000000e+00> : vector<128x256xf32>
    %27 = tpu.matmul %24, %26, %cst_14 {dimension_numbers = #tpu.dot_dimension_numbers<[1], [0], [0], [1], [0, 0, 1, 1], [], []>} : vector<128x512xbf16>, vector<512x256xbf16>, vector<128x256xf32> -> vector<128x256xf32>
    %28 = arith.addf %3, %27 : vector<128x256xf32>
    %c0_15 = arith.constant 0 : index
    %c0_16 = arith.constant 0 : index
    %29 = vector.load %arg5[%c0_15, %c0_16] : memref<128x256xf32, #tpu.memory_space<vmem>>, vector<128x256xf32>
    tpu.vector_store %arg5[%c0_15, %c0_16], %28 {strides = array<i32>} : memref<128x256xf32, #tpu.memory_space<vmem>>, vector<128x256xf32>,
    return
  }
  func.func @transform_0(%arg0: i32, %arg1: i32) -> (i32, i32) {
    %c0_i32 = arith.constant 0 : i32
    %c0_i32_0 = arith.constant 0 : i32
    return %arg0, %c0_i32 : i32, i32
  }
  func.func @transform_1(%arg0: i32, %arg1: i32) -> (i32, i32, i32) {
    %c0_i32 = arith.constant 0 : i32
    %c0_i32_0 = arith.constant 0 : i32
    %c0_i32_1 = arith.constant 0 : i32
    return %arg1, %c0_i32, %c0_i32_0 : i32, i32, i32
  }
  func.func @transform_2(%arg0: i32, %arg1: i32) -> (i32, i32, i32) {
    %c0_i32 = arith.constant 0 : i32
    %c0_i32_0 = arith.constant 0 : i32
    %c0_i32_1 = arith.constant 0 : i32
    return %arg1, %c0_i32, %c0_i32_0 : i32, i32, i32
  }
  func.func @transform_3(%arg0: i32, %arg1: i32) -> (i32, i32) {
    %c0_i32 = arith.constant 0 : i32
    %c0_i32_0 = arith.constant 0 : i32
    return %arg0, %c0_i32 : i32, i32
  }
}

</mosaic_0001>

<llo_original>
// kernel: _gemma_mlp_pallas.1
$region0: #{_gemma_mlp_pallas.1}
  #allocation0 [shape = 'u32[]', space=smem, size = 0x4, offset = 0x4, fixed_abs, tag = 'smem constant byte address 0x4 - core index']
  #allocation1 [shape = 'u32[144,128]{1,0:T(1,128)}', space=vmem, size = 0x12000, scoped, tag = 'internal scratch']
  %s0 = inlined_call_operand.hbm [shape: bf16[256,256], index: 0, kind: input, shape index: {}]
  %s1 = inlined_call_operand.hbm [shape: bf16[1,256,1024], index: 1, kind: input, shape index: {}]
  %s2 = inlined_call_operand.hbm [shape: bf16[1,512,256], index: 2, kind: input, shape index: {}]
  %s3 = inlined_call_operand.hbm [shape: f32[256,256], index: 3, kind: output, shape index: {}]
  %s4 = sld [smem:[#allocation0]]
  $region61: #{_gemma_mlp_pallas.1} parent=0
    _
  %s6 = ssub.s32 1, %s4
  %s7 = scalar_select 0, %s6, %s4
  $region1: #{_gemma_mlp_pallas.1} parent=0
    #allocation2 [shape = 'u8[131072]{0}', space=vmem, size = 0x20000, scoped, tag = 'input window, operand 0']
    #allocation3 [shape = 's32[2]{0}', space=sflag, size = 0x8, scoped, tag = 'scoped memory for _gemma_mlp_pallas.1']
    #allocation4 [shape = 's32[2]{0}', space=sflag, size = 0x8, scoped, tag = 'scoped memory for _gemma_mlp_pallas.1']
    #allocation5 [shape = 'u8[524288]{0}', space=vmem, size = 0x80000, scoped, tag = 'input window, operand 1, single buffered']
    #allocation6 [shape = 's32[1]{0}', space=sflag, size = 0x4, scoped, tag = 'scoped memory for _gemma_mlp_pallas.1']
    #allocation7 [shape = 'u8[262144]{0}', space=vmem, size = 0x40000, scoped, tag = 'input window, operand 2, single buffered']
    #allocation8 [shape = 'u8[262144]{0}', space=vmem, size = 0x40000, scoped, tag = 'output window, operand 0']
    %8 = vsyncpa [#allocation3], 0
    %s9 = scalar_lea.sflag [#allocation3], 1
    %10 = vsyncpa %s9, 0
    %11 = vsyncpa [#allocation6], 0
    %12 = vsyncpa [#allocation4], 0
    %s13 = scalar_lea.sflag [#allocation4], 1
    %14 = vsyncpa %s13, 0
    loop: start=0, step=1, limit=4
    $region2: #{_gemma_mlp_pallas.1} parent=1 // loop_pre_header
      _
    $region3: #{_gemma_mlp_pallas.1} parent=1 // loop_header
      %s16 = sphi 0, %s20
      %p17 = scmp.ge.s32.totalorder %s16, 4
      %s23 = sphi 0, %s35
      %s24 = sphi 0, %s31
      %s25 = sphi 0, %s23
      %s26 = sphi 0, %s24
      %s27 = sphi 0, %s25
      %s28 = sphi 0, %s26
      %s38 = sphi 0, %s40
      %s41 = sphi 0, %s38
      %s42 = sphi 0, %s41
      %s58 = sphi 0, %s42
      %s64 = sphi 0, %s66
      %s67 = sphi 0, %s64
      %s68 = sphi 0, %s67
      %s84 = sphi 0, %s68
      %s90 = sphi 0, %s92
      %s93 = sphi 0, %s90
      %s94 = sphi 0, %s93
      %s110 = sphi 0, %s94
      %s116 = sphi 0, %s118
      %s119 = sphi 0, %s116
      %s120 = sphi 0, %s119
      %s136 = sphi 0, %s120
    $region4: #{_gemma_mlp_pallas.1} parent=1 // loop_header_branch
      %19 = sbr.rel (%p17) target = $region8
    $region5: #{_gemma_mlp_pallas.1} parent=1 // loop_body
      %s21 = ssub.s32 %s16, 1
      %s22 = ssub.s32 %s16, 2
      %s29 = sadd.s32 1, %s24
      %p30 = scmp.ge.s32.totalorder %s29, 1
      %s31 = scalar_select %p30, 0, %s29
      %s32 = sadd.s32 1, %s23
      %s33 = scalar_select %p30, %s32, %s23
      %p34 = scmp.ge.s32.totalorder %s33, 2
      %s35 = scalar_select %p34, 0, %s33
      %s36 = ssub.s32 %s23, %s35
      %p37 = scmp.eq.s32.totalorder %s36, 0
      %s39 = sadd.s32 %s38, 1
      %s40 = scalar_select %p37, %s38, %s39
      %p43 = pneg %p37
      %p44 = scmp.eq.s32.totalorder %s16, 1
      %p45 = por %p43, %p44
      %p46 = scmp.ne.s32.totalorder %s38, %s41
      %p47 = scmp.eq.s32.totalorder %s16, 0
      %p48 = por %p46, %p47
      %p49 = scmp.ne.s32.totalorder %s38, %s41
      %p50 = scmp.eq.s32.totalorder %s21, 1
      %p51 = por %p49, %p50
      %p52 = scmp.ne.s32.totalorder %s41, %s42
      %p53 = scmp.eq.s32.totalorder %s21, 0
      %p54 = por %p52, %p53
      %p55 = scmp.ne.s32.totalorder %s41, %s42
      %p56 = scmp.eq.s32.totalorder %s22, 1
      %p57 = por %p55, %p56
      %p59 = scmp.ne.s32.totalorder %s42, %s58
      %p60 = scmp.eq.s32.totalorder %s22, 0
      %p61 = por %p59, %p60
      %s62 = ssub.s32 %s24, %s31
      %p63 = scmp.eq.s32.totalorder %s62, 0
      %s65 = sadd.s32 %s64, 1
      %s66 = scalar_select %p63, %s64, %s65
      %p69 = pneg %p63
      %p70 = scmp.eq.s32.totalorder %s16, 1
      %p71 = por %p69, %p70
      %p72 = scmp.ne.s32.totalorder %s64, %s67
      %p73 = scmp.eq.s32.totalorder %s16, 0
      %p74 = por %p72, %p73
      %p75 = scmp.ne.s32.totalorder %s64, %s67
      %p76 = scmp.eq.s32.totalorder %s21, 1
      %p77 = por %p75, %p76
      %p78 = scmp.ne.s32.totalorder %s67, %s68
      %p79 = scmp.eq.s32.totalorder %s21, 0
      %p80 = por %p78, %p79
      %p81 = scmp.ne.s32.totalorder %s67, %s68
      %p82 = scmp.eq.s32.totalorder %s22, 1
      %p83 = por %p81, %p82
      %p85 = scmp.ne.s32.totalorder %s68, %s84
      %p86 = scmp.eq.s32.totalorder %s22, 0
      %p87 = por %p85, %p86
      %s88 = ssub.s32 %s24, %s31
      %p89 = scmp.eq.s32.totalorder %s88, 0
      %s91 = sadd.s32 %s90, 1
      %s92 = scalar_select %p89, %s90, %s91
      %p95 = pneg %p89
      %p96 = scmp.eq.s32.totalorder %s16, 1
      %p97 = por %p95, %p96
      %p98 = scmp.ne.s32.totalorder %s90, %s93
      %p99 = scmp.eq.s32.totalorder %s16, 0
      %p100 = por %p98, %p99
      %p101 = scmp.ne.s32.totalorder %s90, %s93
      %p102 = scmp.eq.s32.totalorder %s21, 1
      %p103 = por %p101, %p102
      %p104 = scmp.ne.s32.totalorder %s93, %s94
      %p105 = scmp.eq.s32.totalorder %s21, 0
      %p106 = por %p104, %p105
      %p107 = scmp.ne.s32.totalorder %s93, %s94
      %p108 = scmp.eq.s32.totalorder %s22, 1
      %p109 = por %p107, %p108
      %p111 = scmp.ne.s32.totalorder %s94, %s110
      %p112 = scmp.eq.s32.totalorder %s22, 0
      %p113 = por %p111, %p112
      %s114 = ssub.s32 %s23, %s35
      %p115 = scmp.eq.s32.totalorder %s114, 0
      %s117 = sadd.s32 %s116, 1
      %s118 = scalar_select %p115, %s116, %s117
      %p121 = pneg %p115
      %p122 = scmp.eq.s32.totalorder %s16, 1
      %p123 = por %p121, %p122
      %p124 = scmp.ne.s32.totalorder %s116, %s119
      %p125 = scmp.eq.s32.totalorder %s16, 0
      %p126 = por %p124, %p125
      %p127 = scmp.ne.s32.totalorder %s116, %s119
      %p128 = scmp.eq.s32.totalorder %s21, 1
      %p129 = por %p127, %p128
      %p130 = scmp.ne.s32.totalorder %s119, %s120
      %p131 = scmp.eq.s32.totalorder %s21, 0
      %p132 = por %p130, %p131
      %p133 = scmp.ne.s32.totalorder %s119, %s120
      %p134 = scmp.eq.s32.totalorder %s22, 1
      %p135 = por %p133, %p134
      %p137 = scmp.ne.s32.totalorder %s120, %s136
      %p138 = scmp.eq.s32.totalorder %s22, 0
      %p139 = por %p137, %p138
      %p140 = scmp.le.s32.totalorder 1, %s16
      %p141 = scmp.lt.s32.totalorder %s16, 3
      %p142 = pnand %p140, %p141
      %p143 = pneg %p142
      // Predicated region
      $region9: #{_gemma_mlp_pallas.1} parent=5 // pred_check
        _
      $region10: #{_gemma_mlp_pallas.1} parent=5 // pred_check_branch
        %145 = sbr.rel (%p142) target = $region12
      $region11: #{_gemma_mlp_pallas.1} parent=5 // pred_region
        %s146 = ssub.s32 %s16, 1
        // Predicated region
        $region13: #{_gemma_mlp_pallas.1} parent=11 // pred_check
          %p147 = pneg %p80
        $region14: #{_gemma_mlp_pallas.1} parent=11 // pred_check_branch
          %149 = sbr.rel (%p147) target = $region16
        $region15: #{_gemma_mlp_pallas.1} parent=11 // pred_region
          %s151 = ssub.s32 16384, 16384
          %152 = vsyncadd [#allocation6], %s151
          %s153 = smul.addr %s26, 256
          %s154 = smul.addr %s153, 64
          %s155 = scalar_lea.hbm %s1, %s154
          %s156 = sshll.u32 [#allocation5], 4
          %s157 = int_to_ptr.vmem [resolvable:$true] %s156
          %162 = dma.hbm_to_vmem [thread:$0]  %s155, 16384, %s157, [#allocation6], 512, 512, 32
        $region16: #{_gemma_mlp_pallas.1} parent=11 // pred_fallthru
          _
        // Predicated region
        $region17: #{_gemma_mlp_pallas.1} parent=11 // pred_check
          %p163 = pneg %p106
        $region18: #{_gemma_mlp_pallas.1} parent=11 // pred_check_branch
          %165 = sbr.rel (%p163) target = $region20
        $region19: #{_gemma_mlp_pallas.1} parent=11 // pred_region
          %s167 = ssub.s32 8192, 8192
          %168 = vsyncadd [#allocation6], %s167
          %s169 = smul.addr %s26, 128
          %s170 = smul.addr %s169, 64
          %s171 = scalar_lea.hbm %s2, %s170
          %s172 = sshll.u32 [#allocation7], 4
          %s173 = int_to_ptr.vmem [resolvable:$true] %s172
          %178 = dma.hbm_to_vmem [thread:$0]  %s171, 8192, %s173, [#allocation6], 128, 128, 8
        $region20: #{_gemma_mlp_pallas.1} parent=11 // pred_fallthru
          _
      $region12: #{_gemma_mlp_pallas.1} parent=5 // pred_fallthru
        _
      %p179 = scmp.lt.s32.totalorder %s16, 2
      // Predicated region
      $region21: #{_gemma_mlp_pallas.1} parent=5 // pred_check
        %p180 = pneg %p179
      $region22: #{_gemma_mlp_pallas.1} parent=5 // pred_check_branch
        %182 = sbr.rel (%p180) target = $region24
      $region23: #{_gemma_mlp_pallas.1} parent=5 // pred_region
        // Predicated region
        $region25: #{_gemma_mlp_pallas.1} parent=23 // pred_check
          %p183 = pneg %p48
        $region26: #{_gemma_mlp_pallas.1} parent=23 // pred_check_branch
          %185 = sbr.rel (%p183) target = $region28
        $region27: #{_gemma_mlp_pallas.1} parent=23 // pred_region
          %s186 = sand.u32 %s38, 1
          %s187 = scalar_lea.sflag [#allocation3], %s186
          %s188 = sand.u32 %s38, 1
          %s189 = smul.addr %s188, 128
          %s190 = scalar_lea.vmem [#allocation2], %s189
          %s191 = smul.u32 16, %s23
          %s193 = ssub.s32 2048, 2048
          %194 = vsyncadd %s187, %s193
          %s195 = smul.addr %s191, 2
          %s196 = smul.addr %s195, 64
          %s197 = scalar_lea.hbm %s0, %s196
          %s198 = sshll.u32 %s190, 4
          %s199 = int_to_ptr.vmem [resolvable:$true] %s198
          %204 = dma.hbm_to_vmem [thread:$0]  %s197, 2048, %s199, %s187, 128, 128, 8
        $region28: #{_gemma_mlp_pallas.1} parent=23 // pred_fallthru
          _
      $region24: #{_gemma_mlp_pallas.1} parent=5 // pred_fallthru
        _
      %p205 = scmp.le.s32.totalorder 1, %s16
      %p206 = scmp.lt.s32.totalorder %s16, 3
      %p207 = pnand %p205, %p206
      %p208 = pneg %p207
      // Predicated region
      $region29: #{_gemma_mlp_pallas.1} parent=5 // pred_check
        _
      $region30: #{_gemma_mlp_pallas.1} parent=5 // pred_check_branch
        %210 = sbr.rel (%p207) target = $region32
      $region31: #{_gemma_mlp_pallas.1} parent=5 // pred_region
        %s211 = ssub.s32 %s16, 1
        %s212 = sand.u32 %s41, 1
        %s213 = scalar_lea.sflag [#allocation3], %s212
        %s214 = sand.u32 %s41, 1
        %s215 = smul.addr %s214, 128
        %s216 = scalar_lea.vmem [#allocation2], %s215
        // Predicated region
        $region33: #{_gemma_mlp_pallas.1} parent=31 // pred_check
          %p217 = pneg %p54
        $region34: #{_gemma_mlp_pallas.1} parent=31 // pred_check_branch
          %219 = sbr.rel (%p217) target = $region36
        $region35: #{_gemma_mlp_pallas.1} parent=31 // pred_region
          %220 = dma.done %s213, 2048
        $region36: #{_gemma_mlp_pallas.1} parent=31 // pred_fallthru
          _
        // Predicated region
        $region37: #{_gemma_mlp_pallas.1} parent=31 // pred_check
          %p221 = pneg %p80
        $region38: #{_gemma_mlp_pallas.1} parent=31 // pred_check_branch
          %223 = sbr.rel (%p221) target = $region40
        $region39: #{_gemma_mlp_pallas.1} parent=31 // pred_region
          %224 = dma.done [#allocation6], 16384
        $region40: #{_gemma_mlp_pallas.1} parent=31 // pred_fallthru
          _
        // Predicated region
        $region41: #{_gemma_mlp_pallas.1} parent=31 // pred_check
          %p225 = pneg %p106
        $region42: #{_gemma_mlp_pallas.1} parent=31 // pred_check_branch
          %227 = sbr.rel (%p225) target = $region44
        $region43: #{_gemma_mlp_pallas.1} parent=31 // pred_region
          %228 = dma.done [#allocation6], 8192
        $region44: #{_gemma_mlp_pallas.1} parent=31 // pred_fallthru
          _
        %s229 = sand.u32 %s41, 1
        %s230 = scalar_lea.sflag [#allocation3], %s229
        %s231 = sand.u32 %s41, 1
        %s232 = smul.addr %s231, 128
        %s233 = scalar_lea.vmem [#allocation2], %s232
        %p234 = pneg %p54
        %p235 = pneg %p51
        %p236 = pneg %p80
        %p237 = pneg %p77
        %p238 = pneg %p106
        %p239 = pneg %p103
        %p240 = pneg %p132
        %p241 = pneg %p129
        %s242 = sand.u32 %s119, 1
        %s243 = scalar_lea.sflag [#allocation4], %s242
        %s244 = sand.u32 %s119, 1
        %s245 = smul.addr %s244, 256
        %s246 = scalar_lea.vmem [#allocation8], %s245
        %s247 = smul.u32 16, %s25
        %s248 = smul.u32 16, %s25
        %p249 = scmp.eq.s32.totalorder %s26, 0
        // Predicated region
        $region45: #{_gemma_mlp_pallas.1} parent=31 // pred_check
          %p250 = pneg %p249
        $region46: #{_gemma_mlp_pallas.1} parent=31 // pred_check_branch
          %252 = sbr.rel (%p250) target = $region48
        $region47: #{_gemma_mlp_pallas.1} parent=31 // pred_region
          %253 = vst [vmem:[%s246] sm:$0xff] 0.0
          %254 = vst [vmem:[%s246 + $0x8] sm:$0xff] 0.0
          %255 = vst [vmem:[%s246 + $0x10] sm:$0xff] 0.0
          %256 = vst [vmem:[%s246 + $0x18] sm:$0xff] 0.0
          %257 = vst [vmem:[%s246 + $0x20] sm:$0xff] 0.0
          %258 = vst [vmem:[%s246 + $0x28] sm:$0xff] 0.0
          %259 = vst [vmem:[%s246 + $0x30] sm:$0xff] 0.0
          %260 = vst [vmem:[%s246 + $0x38] sm:$0xff] 0.0
          %261 = vst [vmem:[%s246 + $0x40] sm:$0xff] 0.0
          %262 = vst [vmem:[%s246 + $0x48] sm:$0xff] 0.0
          %263 = vst [vmem:[%s246 + $0x50] sm:$0xff] 0.0
          %264 = vst [vmem:[%s246 + $0x58] sm:$0xff] 0.0
          %265 = vst [vmem:[%s246 + $0x60] sm:$0xff] 0.0
          %266 = vst [vmem:[%s246 + $0x68] sm:$0xff] 0.0
          %267 = vst [vmem:[%s246 + $0x70] sm:$0xff] 0.0
          %268 = vst [vmem:[%s246 + $0x78] sm:$0xff] 0.0
          %269 = vst [vmem:[%s246 + $0x80] sm:$0xff] 0.0
          %270 = vst [vmem:[%s246 + $0x88] sm:$0xff] 0.0
          %271 = vst [vmem:[%s246 + $0x90] sm:$0xff] 0.0
          %272 = vst [vmem:[%s246 + $0x98] sm:$0xff] 0.0
          %273 = vst [vmem:[%s246 + $0xa0] sm:$0xff] 0.0
          %274 = vst [vmem:[%s246 + $0xa8] sm:$0xff] 0.0
          %275 = vst [vmem:[%s246 + $0xb0] sm:$0xff] 0.0
          %276 = vst [vmem:[%s246 + $0xb8] sm:$0xff] 0.0
          %277 = vst [vmem:[%s246 + $0xc0] sm:$0xff] 0.0
          %278 = vst [vmem:[%s246 + $0xc8] sm:$0xff] 0.0
          %279 = vst [vmem:[%s246 + $0xd0] sm:$0xff] 0.0
          %280 = vst [vmem:[%s246 + $0xd8] sm:$0xff] 0.0
          %281 = vst [vmem:[%s246 + $0xe0] sm:$0xff] 0.0
          %282 = vst [vmem:[%s246 + $0xe8] sm:$0xff] 0.0
          %283 = vst [vmem:[%s246 + $0xf0] sm:$0xff] 0.0
          %284 = vst [vmem:[%s246 + $0xf8] sm:$0xff] 0.0
        $region48: #{_gemma_mlp_pallas.1} parent=31 // pred_fallthru
          _
        %v285 = vld [vmem:[%s246] sm:$0xff]
        %v286 = vld [vmem:[%s246 + $0x8] sm:$0xff]
        %v287 = vld [vmem:[%s246 + $0x10] sm:$0xff]
        %v288 = vld [vmem:[%s246 + $0x18] sm:$0xff]
        %v289 = vld [vmem:[%s246 + $0x20] sm:$0xff]
        %v290 = vld [vmem:[%s246 + $0x28] sm:$0xff]
        %v291 = vld [vmem:[%s246 + $0x30] sm:$0xff]
        %v292 = vld [vmem:[%s246 + $0x38] sm:$0xff]
        %v293 = vld [vmem:[%s246 + $0x40] sm:$0xff]
        %v294 = vld [vmem:[%s246 + $0x48] sm:$0xff]
        %v295 = vld [vmem:[%s246 + $0x50] sm:$0xff]
        %v296 = vld [vmem:[%s246 + $0x58] sm:$0xff]
        %v297 = vld [vmem:[%s246 + $0x60] sm:$0xff]
        %v298 = vld [vmem:[%s246 + $0x68] sm:$0xff]
        %v299 = vld [vmem:[%s246 + $0x70] sm:$0xff]
        %v300 = vld [vmem:[%s246 + $0x78] sm:$0xff]
        %v301 = vld [vmem:[%s246 + $0x80] sm:$0xff]
        %v302 = vld [vmem:[%s246 + $0x88] sm:$0xff]
        %v303 = vld [vmem:[%s246 + $0x90] sm:$0xff]
        %v304 = vld [vmem:[%s246 + $0x98] sm:$0xff]
        %v305 = vld [vmem:[%s246 + $0xa0] sm:$0xff]
        %v306 = vld [vmem:[%s246 + $0xa8] sm:$0xff]
        %v307 = vld [vmem:[%s246 + $0xb0] sm:$0xff]
        %v308 = vld [vmem:[%s246 + $0xb8] sm:$0xff]
        %v309 = vld [vmem:[%s246 + $0xc0] sm:$0xff]
        %v310 = vld [vmem:[%s246 + $0xc8] sm:$0xff]
        %v311 = vld [vmem:[%s246 + $0xd0] sm:$0xff]
        %v312 = vld [vmem:[%s246 + $0xd8] sm:$0xff]
        %v313 = vld [vmem:[%s246 + $0xe0] sm:$0xff]
        %v314 = vld [vmem:[%s246 + $0xe8] sm:$0xff]
        %v315 = vld [vmem:[%s246 + $0xf0] sm:$0xff]
        %v316 = vld [vmem:[%s246 + $0xf8] sm:$0xff]
        %v317 = vld [vmem:[%s216] sm:$0xff]
        %v318 = vld [vmem:[%s216 + $0x8] sm:$0xff]
        %v319 = vld [vmem:[%s216 + $0x10] sm:$0xff]
        %v320 = vld [vmem:[%s216 + $0x18] sm:$0xff]
        %v321 = vld [vmem:[%s216 + $0x20] sm:$0xff]
        %v322 = vld [vmem:[%s216 + $0x28] sm:$0xff]
        %v323 = vld [vmem:[%s216 + $0x30] sm:$0xff]
        %v324 = vld [vmem:[%s216 + $0x38] sm:$0xff]
        %v325 = vld [vmem:[%s216 + $0x40] sm:$0xff]
        %v326 = vld [vmem:[%s216 + $0x48] sm:$0xff]
        %v327 = vld [vmem:[%s216 + $0x50] sm:$0xff]
        %v328 = vld [vmem:[%s216 + $0x58] sm:$0xff]
        %v329 = vld [vmem:[%s216 + $0x60] sm:$0xff]
        %v330 = vld [vmem:[%s216 + $0x68] sm:$0xff]
        %v331 = vld [vmem:[%s216 + $0x70] sm:$0xff]
        %v332 = vld [vmem:[%s216 + $0x78] sm:$0xff]
        %v333 = vld [vmem:[#allocation5] sm:$0xff]
        %v334 = vld [vmem:[#allocation5 + $0x8] sm:$0xff]
        %v335 = vld [vmem:[#allocation5 + $0x10] sm:$0xff]
        %v336 = vld [vmem:[#allocation5 + $0x18] sm:$0xff]
        %v337 = vld [vmem:[#allocation5 + $0x20] sm:$0xff]
        %v338 = vld [vmem:[#allocation5 + $0x28] sm:$0xff]
        %v339 = vld [vmem:[#allocation5 + $0x30] sm:$0xff]
        %v340 = vld [vmem:[#allocation5 + $0x38] sm:$0xff]
        %v341 = vld [vmem:[#allocation5 + $0x40] sm:$0xff]
        %v342 = vld [vmem:[#allocation5 + $0x48] sm:$0xff]
        %v343 = vld [vmem:[#allocation5 + $0x50] sm:$0xff]
        %v344 = vld [vmem:[#allocation5 + $0x58] sm:$0xff]
        %v345 = vld [vmem:[#allocation5 + $0x60] sm:$0xff]
        %v346 = vld [vmem:[#allocation5 + $0x68] sm:$0xff]
        %v347 = vld [vmem:[#allocation5 + $0x70] sm:$0xff]
        %v348 = vld [vmem:[#allocation5 + $0x78] sm:$0xff]
        %v349 = vld [vmem:[#allocation5 + $0x80] sm:$0xff]
        %v350 = vld [vmem:[#allocation5 + $0x88] sm:$0xff]
        %v351 = vld [vmem:[#allocation5 + $0x90] sm:$0xff]
        %v352 = vld [vmem:[#allocation5 + $0x98] sm:$0xff]
        %v353 = vld [vmem:[#allocation5 + $0xa0] sm:$0xff]
        %v354 = vld [vmem:[#allocation5 + $0xa8] sm:$0xff]
        %v355 = vld [vmem:[#allocation5 + $0xb0] sm:$0xff]
        %v356 = vld [vmem:[#allocation5 + $0xb8] sm:$0xff]
        %v357 = vld [vmem:[#allocation5 + $0xc0] sm:$0xff]
        %v358 = vld [vmem:[#allocation5 + $0xc8] sm:$0xff]
        %v359 = vld [vmem:[#allocation5 + $0xd0] sm:$0xff]
        %v360 = vld [vmem:[#allocation5 + $0xd8] sm:$0xff]
        %v361 = vld [vmem:[#allocation5 + $0xe0] sm:$0xff]
        %v362 = vld [vmem:[#allocation5 + $0xe8] sm:$0xff]
        %v363 = vld [vmem:[#allocation5 + $0xf0] sm:$0xff]
        %v364 = vld [vmem:[#allocation5 + $0xf8] sm:$0xff]
        %v365 = vld [vmem:[#allocation5 + $0x100] sm:$0xff]
        %v366 = vld [vmem:[#allocation5 + $0x108] sm:$0xff]
        %v367 = vld [vmem:[#allocation5 + $0x110] sm:$0xff]
        %v368 = vld [vmem:[#allocation5 + $0x118] sm:$0xff]
        %v369 = vld [vmem:[#allocation5 + $0x120] sm:$0xff]
        %v370 = vld [vmem:[#allocation5 + $0x128] sm:$0xff]
        %v371 = vld [vmem:[#allocation5 + $0x130] sm:$0xff]
        %v372 = vld [vmem:[#allocation5 + $0x138] sm:$0xff]
        %v373 = vld [vmem:[#allocation5 + $0x140] sm:$0xff]
        %v374 = vld [vmem:[#allocation5 + $0x148] sm:$0xff]
        %v375 = vld [vmem:[#allocation5 + $0x150] sm:$0xff]
        %v376 = vld [vmem:[#allocation5 + $0x158] sm:$0xff]
        %v377 = vld [vmem:[#allocation5 + $0x160] sm:$0xff]
        %v378 = vld [vmem:[#allocation5 + $0x168] sm:$0xff]
        %v379 = vld [vmem:[#allocation5 + $0x170] sm:$0xff]
        %v380 = vld [vmem:[#allocation5 + $0x178] sm:$0xff]
        %v381 = vld [vmem:[#allocation5 + $0x180] sm:$0xff]
        %v382 = vld [vmem:[#allocation5 + $0x188] sm:$0xff]
        %v383 = vld [vmem:[#allocation5 + $0x190] sm:$0xff]
        %v384 = vld [vmem:[#allocation5 + $0x198] sm:$0xff]
        %v385 = vld [vmem:[#allocation5 + $0x1a0] sm:$0xff]
        %v386 = vld [vmem:[#allocation5 + $0x1a8] sm:$0xff]
        %v387 = vld [vmem:[#allocation5 + $0x1b0] sm:$0xff]
        %v388 = vld [vmem:[#allocation5 + $0x1b8] sm:$0xff]
        %v389 = vld [vmem:[#allocation5 + $0x1c0] sm:$0xff]
        %v390 = vld [vmem:[#allocation5 + $0x1c8] sm:$0xff]
        %v391 = vld [vmem:[#allocation5 + $0x1d0] sm:$0xff]
        %v392 = vld [vmem:[#allocation5 + $0x1d8] sm:$0xff]
        %v393 = vld [vmem:[#allocation5 + $0x1e0] sm:$0xff]
        %v394 = vld [vmem:[#allocation5 + $0x1e8] sm:$0xff]
        %v395 = vld [vmem:[#allocation5 + $0x1f0] sm:$0xff]
        %v396 = vld [vmem:[#allocation5 + $0x1f8] sm:$0xff]
        %v397 = vld [vmem:[#allocation5 + $0x200] sm:$0xff]
        %v398 = vld [vmem:[#allocation5 + $0x208] sm:$0xff]
        %v399 = vld [vmem:[#allocation5 + $0x210] sm:$0xff]
        %v400 = vld [vmem:[#allocation5 + $0x218] sm:$0xff]
        %v401 = vld [vmem:[#allocation5 + $0x220] sm:$0xff]
        %v402 = vld [vmem:[#allocation5 + $0x228] sm:$0xff]
        %v403 = vld [vmem:[#allocation5 + $0x230] sm:$0xff]
        %v404 = vld [vmem:[#allocation5 + $0x238] sm:$0xff]
        %v405 = vld [vmem:[#allocation5 + $0x240] sm:$0xff]
        %v406 = vld [vmem:[#allocation5 + $0x248] sm:$0xff]
        %v407 = vld [vmem:[#allocation5 + $0x250] sm:$0xff]
        %v408 = vld [vmem:[#allocation5 + $0x258] sm:$0xff]
        %v409 = vld [vmem:[#allocation5 + $0x260] sm:$0xff]
        %v410 = vld [vmem:[#allocation5 + $0x268] sm:$0xff]
        %v411 = vld [vmem:[#allocation5 + $0x270] sm:$0xff]
        %v412 = vld [vmem:[#allocation5 + $0x278] sm:$0xff]
        %v413 = vld [vmem:[#allocation5 + $0x280] sm:$0xff]
        %v414 = vld [vmem:[#allocation5 + $0x288] sm:$0xff]
        %v415 = vld [vmem:[#allocation5 + $0x290] sm:$0xff]
        %v416 = vld [vmem:[#allocation5 + $0x298] sm:$0xff]
        %v417 = vld [vmem:[#allocation5 + $0x2a0] sm:$0xff]
        %v418 = vld [vmem:[#allocation5 + $0x2a8] sm:$0xff]
        %v419 = vld [vmem:[#allocation5 + $0x2b0] sm:$0xff]
        %v420 = vld [vmem:[#allocation5 + $0x2b8] sm:$0xff]
        %v421 = vld [vmem:[#allocation5 + $0x2c0] sm:$0xff]
        %v422 = vld [vmem:[#allocation5 + $0x2c8] sm:$0xff]
        %v423 = vld [vmem:[#allocation5 + $0x2d0] sm:$0xff]
        %v424 = vld [vmem:[#allocation5 + $0x2d8] sm:$0xff]
        %v425 = vld [vmem:[#allocation5 + $0x2e0] sm:$0xff]
        %v426 = vld [vmem:[#allocation5 + $0x2e8] sm:$0xff]
        %v427 = vld [vmem:[#allocation5 + $0x2f0] sm:$0xff]
        %v428 = vld [vmem:[#allocation5 + $0x2f8] sm:$0xff]
        %v429 = vld [vmem:[#allocation5 + $0x300] sm:$0xff]
        %v430 = vld [vmem:[#allocation5 + $0x308] sm:$0xff]
        %v431 = vld [vmem:[#allocation5 + $0x310] sm:$0xff]
        %v432 = vld [vmem:[#allocation5 + $0x318] sm:$0xff]
        %v433 = vld [vmem:[#allocation5 + $0x320] sm:$0xff]
        %v434 = vld [vmem:[#allocation5 + $0x328] sm:$0xff]
        %v435 = vld [vmem:[#allocation5 + $0x330] sm:$0xff]
        %v436 = vld [vmem:[#allocation5 + $0x338] sm:$0xff]
        %v437 = vld [vmem:[#allocation5 + $0x340] sm:$0xff]
        %v438 = vld [vmem:[#allocation5 + $0x348] sm:$0xff]
        %v439 = vld [vmem:[#allocation5 + $0x350] sm:$0xff]
        %v440 = vld [vmem:[#allocation5 + $0x358] sm:$0xff]
        %v441 = vld [vmem:[#allocation5 + $0x360] sm:$0xff]
        %v442 = vld [vmem:[#allocation5 + $0x368] sm:$0xff]
        %v443 = vld [vmem:[#allocation5 + $0x370] sm:$0xff]
        %v444 = vld [vmem:[#allocation5 + $0x378] sm:$0xff]
        %v445 = vld [vmem:[#allocation5 + $0x380] sm:$0xff]
        %v446 = vld [vmem:[#allocation5 + $0x388] sm:$0xff]
        %v447 = vld [vmem:[#allocation5 + $0x390] sm:$0xff]
        %v448 = vld [vmem:[#allocation5 + $0x398] sm:$0xff]
        %v449 = vld [vmem:[#allocation5 + $0x3a0] sm:$0xff]
        %v450 = vld [vmem:[#allocation5 + $0x3a8] sm:$0xff]
        %v451 = vld [vmem:[#allocation5 + $0x3b0] sm:$0xff]
        %v452 = vld [vmem:[#allocation5 + $0x3b8] sm:$0xff]
        %v453 = vld [vmem:[#allocation5 + $0x3c0] sm:$0xff]
        %v454 = vld [vmem:[#allocation5 + $0x3c8] sm:$0xff]
        %v455 = vld [vmem:[#allocation5 + $0x3d0] sm:$0xff]
        %v456 = vld [vmem:[#allocation5 + $0x3d8] sm:$0xff]
        %v457 = vld [vmem:[#allocation5 + $0x3e0] sm:$0xff]
        %v458 = vld [vmem:[#allocation5 + $0x3e8] sm:$0xff]
        %v459 = vld [vmem:[#allocation5 + $0x3f0] sm:$0xff]
        %v460 = vld [vmem:[#allocation5 + $0x3f8] sm:$0xff]
        %v477 = vunpack.c.l.b16 %v317
        %v478 = vunpack.c.h.b16 %v317
        %v479 = vunpack.c.l.b16 %v318
        %v480 = vunpack.c.h.b16 %v318
        %v481 = vunpack.c.l.b16 %v319
        %v482 = vunpack.c.h.b16 %v319
        %v483 = vunpack.c.l.b16 %v320
        %v484 = vunpack.c.h.b16 %v320
        %v485 = vunpack.c.l.b16 %v321
        %v486 = vunpack.c.h.b16 %v321
        %v487 = vunpack.c.l.b16 %v322
        %v488 = vunpack.c.h.b16 %v322
        %v489 = vunpack.c.l.b16 %v323
        %v490 = vunpack.c.h.b16 %v323
        %v491 = vunpack.c.l.b16 %v324
        %v492 = vunpack.c.h.b16 %v324
        %v493 = vunpack.c.l.b16 %v325
        %v494 = vunpack.c.h.b16 %v325
        %v495 = vunpack.c.l.b16 %v326
        %v496 = vunpack.c.h.b16 %v326
        %v497 = vunpack.c.l.b16 %v327
        %v498 = vunpack.c.h.b16 %v327
        %v499 = vunpack.c.l.b16 %v328
        %v500 = vunpack.c.h.b16 %v328
        %v501 = vunpack.c.l.b16 %v329
        %v502 = vunpack.c.h.b16 %v329
        %v503 = vunpack.c.l.b16 %v330
        %v504 = vunpack.c.h.b16 %v330
        %v505 = vunpack.c.l.b16 %v331
        %v506 = vunpack.c.h.b16 %v331
        %v507 = vunpack.c.l.b16 %v332
        %v508 = vunpack.c.h.b16 %v332
        %v509 = vpack.c.b16 %v479, %v477
        %v510 = vpack.c.b16 %v480, %v478
        %v511 = vpack.c.b16 %v483, %v481
        %v512 = vpack.c.b16 %v484, %v482
        %v513 = vpack.c.b16 %v487, %v485
        %v514 = vpack.c.b16 %v488, %v486
        %v515 = vpack.c.b16 %v491, %v489
        %v516 = vpack.c.b16 %v492, %v490
        %v517 = vpack.c.b16 %v495, %v493
        %v518 = vpack.c.b16 %v496, %v494
        %v519 = vpack.c.b16 %v499, %v497
        %v520 = vpack.c.b16 %v500, %v498
        %v521 = vpack.c.b16 %v503, %v501
        %v522 = vpack.c.b16 %v504, %v502
        %v523 = vpack.c.b16 %v507, %v505
        %v524 = vpack.c.b16 %v508, %v506
        %v669 = vunpack.c.l.b16 %v333
        %v670 = vunpack.c.h.b16 %v333
        %v671 = vunpack.c.l.b16 %v334
        %v672 = vunpack.c.h.b16 %v334
        %v673 = vunpack.c.l.b16 %v335
        %v674 = vunpack.c.h.b16 %v335
        %v675 = vunpack.c.l.b16 %v336
        %v676 = vunpack.c.h.b16 %v336
        %v677 = vunpack.c.l.b16 %v337
        %v678 = vunpack.c.h.b16 %v337
        %v679 = vunpack.c.l.b16 %v338
        %v680 = vunpack.c.h.b16 %v338
        %v681 = vunpack.c.l.b16 %v339
        %v682 = vunpack.c.h.b16 %v339
        %v683 = vunpack.c.l.b16 %v340
        %v684 = vunpack.c.h.b16 %v340
        %v685 = vunpack.c.l.b16 %v341
        %v686 = vunpack.c.h.b16 %v341
        %v687 = vunpack.c.l.b16 %v342
        %v688 = vunpack.c.h.b16 %v342
        %v689 = vunpack.c.l.b16 %v343
        %v690 = vunpack.c.h.b16 %v343
        %v691 = vunpack.c.l.b16 %v344
        %v692 = vunpack.c.h.b16 %v344
        %v693 = vunpack.c.l.b16 %v345
        %v694 = vunpack.c.h.b16 %v345
        %v695 = vunpack.c.l.b16 %v346
        %v696 = vunpack.c.h.b16 %v346
        %v697 = vunpack.c.l.b16 %v347
        %v698 = vunpack.c.h.b16 %v347
        %v699 = vunpack.c.l.b16 %v348
        %v700 = vunpack.c.h.b16 %v348
        %v701 = vunpack.c.l.b16 %v349
        %v702 = vunpack.c.h.b16 %v349
        %v703 = vunpack.c.l.b16 %v350
        %v704 = vunpack.c.h.b16 %v350
        %v705 = vunpack.c.l.b16 %v351
        %v706 = vunpack.c.h.b16 %v351
        %v707 = vunpack.c.l.b16 %v352
        %v708 = vunpack.c.h.b16 %v352
        %v709 = vunpack.c.l.b16 %v353
        %v710 = vunpack.c.h.b16 %v353
        %v711 = vunpack.c.l.b16 %v354
        %v712 = vunpack.c.h.b16 %v354
        %v713 = vunpack.c.l.b16 %v355
        %v714 = vunpack.c.h.b16 %v355
        %v715 = vunpack.c.l.b16 %v356
        %v716 = vunpack.c.h.b16 %v356
        %v717 = vunpack.c.l.b16 %v357
        %v718 = vunpack.c.h.b16 %v357
        %v719 = vunpack.c.l.b16 %v358
        %v720 = vunpack.c.h.b16 %v358
        %v721 = vunpack.c.l.b16 %v359
        %v722 = vunpack.c.h.b16 %v359
        %v723 = vunpack.c.l.b16 %v360
        %v724 = vunpack.c.h.b16 %v360
        %v725 = vunpack.c.l.b16 %v361
        %v726 = vunpack.c.h.b16 %v361
        %v727 = vunpack.c.l.b16 %v362
        %v728 = vunpack.c.h.b16 %v362
        %v729 = vunpack.c.l.b16 %v363
        %v730 = vunpack.c.h.b16 %v363
        %v731 = vunpack.c.l.b16 %v364
        %v732 = vunpack.c.h.b16 %v364
        %v733 = vunpack.c.l.b16 %v365
        %v734 = vunpack.c.h.b16 %v365
        %v735 = vunpack.c.l.b16 %v366
        %v736 = vunpack.c.h.b16 %v366
        %v737 = vunpack.c.l.b16 %v367
        %v738 = vunpack.c.h.b16 %v367
        %v739 = vunpack.c.l.b16 %v368
        %v740 = vunpack.c.h.b16 %v368
        %v741 = vunpack.c.l.b16 %v369
        %v742 = vunpack.c.h.b16 %v369
        %v743 = vunpack.c.l.b16 %v370
        %v744 = vunpack.c.h.b16 %v370
        %v745 = vunpack.c.l.b16 %v371
        %v746 = vunpack.c.h.b16 %v371
        %v747 = vunpack.c.l.b16 %v372
        %v748 = vunpack.c.h.b16 %v372
        %v749 = vunpack.c.l.b16 %v373
        %v750 = vunpack.c.h.b16 %v373
        %v751 = vunpack.c.l.b16 %v374
        %v752 = vunpack.c.h.b16 %v374
        %v753 = vunpack.c.l.b16 %v375
        %v754 = vunpack.c.h.b16 %v375
        %v755 = vunpack.c.l.b16 %v376
        %v756 = vunpack.c.h.b16 %v376
        %v757 = vunpack.c.l.b16 %v377
        %v758 = vunpack.c.h.b16 %v377
        %v759 = vunpack.c.l.b16 %v378
        %v760 = vunpack.c.h.b16 %v378
        %v761 = vunpack.c.l.b16 %v379
        %v762 = vunpack.c.h.b16 %v379
        %v763 = vunpack.c.l.b16 %v380
        %v764 = vunpack.c.h.b16 %v380
        %v765 = vunpack.c.l.b16 %v381
        %v766 = vunpack.c.h.b16 %v381
        %v767 = vunpack.c.l.b16 %v382
        %v768 = vunpack.c.h.b16 %v382
        %v769 = vunpack.c.l.b16 %v383
        %v770 = vunpack.c.h.b16 %v383
        %v771 = vunpack.c.l.b16 %v384
        %v772 = vunpack.c.h.b16 %v384
        %v773 = vunpack.c.l.b16 %v385
        %v774 = vunpack.c.h.b16 %v385
        %v775 = vunpack.c.l.b16 %v386
        %v776 = vunpack.c.h.b16 %v386
        %v777 = vunpack.c.l.b16 %v387
        %v778 = vunpack.c.h.b16 %v387
        %v779 = vunpack.c.l.b16 %v388
        %v780 = vunpack.c.h.b16 %v388
        %v781 = vunpack.c.l.b16 %v389
        %v782 = vunpack.c.h.b16 %v389
        %v783 = vunpack.c.l.b16 %v390
        %v784 = vunpack.c.h.b16 %v390
        %v785 = vunpack.c.l.b16 %v391
        %v786 = vunpack.c.h.b16 %v391
        %v787 = vunpack.c.l.b16 %v392
        %v788 = vunpack.c.h.b16 %v392
        %v789 = vunpack.c.l.b16 %v393
        %v790 = vunpack.c.h.b16 %v393
        %v791 = vunpack.c.l.b16 %v394
        %v792 = vunpack.c.h.b16 %v394
        %v793 = vunpack.c.l.b16 %v395
        %v794 = vunpack.c.h.b16 %v395
        %v795 = vunpack.c.l.b16 %v396
        %v796 = vunpack.c.h.b16 %v396
        %v797 = vunpack.c.l.b16 %v397
        %v798 = vunpack.c.h.b16 %v397
        %v799 = vunpack.c.l.b16 %v398
        %v800 = vunpack.c.h.b16 %v398
        %v801 = vunpack.c.l.b16 %v399
        %v802 = vunpack.c.h.b16 %v399
        %v803 = vunpack.c.l.b16 %v400
        %v804 = vunpack.c.h.b16 %v400
        %v805 = vunpack.c.l.b16 %v401
        %v806 = vunpack.c.h.b16 %v401
        %v807 = vunpack.c.l.b16 %v402
        %v808 = vunpack.c.h.b16 %v402
        %v809 = vunpack.c.l.b16 %v403
        %v810 = vunpack.c.h.b16 %v403
        %v811 = vunpack.c.l.b16 %v404
        %v812 = vunpack.c.h.b16 %v404
        %v813 = vunpack.c.l.b16 %v405
        %v814 = vunpack.c.h.b16 %v405
        %v815 = vunpack.c.l.b16 %v406
        %v816 = vunpack.c.h.b16 %v406
        %v817 = vunpack.c.l.b16 %v407
        %v818 = vunpack.c.h.b16 %v407
        %v819 = vunpack.c.l.b16 %v408
        %v820 = vunpack.c.h.b16 %v408
        %v821 = vunpack.c.l.b16 %v409
        %v822 = vunpack.c.h.b16 %v409
        %v823 = vunpack.c.l.b16 %v410
        %v824 = vunpack.c.h.b16 %v410
        %v825 = vunpack.c.l.b16 %v411
        %v826 = vunpack.c.h.b16 %v411
        %v827 = vunpack.c.l.b16 %v412
        %v828 = vunpack.c.h.b16 %v412
        %v829 = vunpack.c.l.b16 %v413
        %v830 = vunpack.c.h.b16 %v413
        %v831 = vunpack.c.l.b16 %v414
        %v832 = vunpack.c.h.b16 %v414
        %v833 = vunpack.c.l.b16 %v415
        %v834 = vunpack.c.h.b16 %v415
        %v835 = vunpack.c.l.b16 %v416
        %v836 = vunpack.c.h.b16 %v416
        %v837 = vunpack.c.l.b16 %v417
        %v838 = vunpack.c.h.b16 %v417
        %v839 = vunpack.c.l.b16 %v418
        %v840 = vunpack.c.h.b16 %v418
        %v841 = vunpack.c.l.b16 %v419
        %v842 = vunpack.c.h.b16 %v419
        %v843 = vunpack.c.l.b16 %v420
        %v844 = vunpack.c.h.b16 %v420
        %v845 = vunpack.c.l.b16 %v421
        %v846 = vunpack.c.h.b16 %v421
        %v847 = vunpack.c.l.b16 %v422
        %v848 = vunpack.c.h.b16 %v422
        %v849 = vunpack.c.l.b16 %v423
        %v850 = vunpack.c.h.b16 %v423
        %v851 = vunpack.c.l.b16 %v424
        %v852 = vunpack.c.h.b16 %v424
        %v853 = vunpack.c.l.b16 %v425
        %v854 = vunpack.c.h.b16 %v425
        %v855 = vunpack.c.l.b16 %v426
        %v856 = vunpack.c.h.b16 %v426
        %v857 = vunpack.c.l.b16 %v427
        %v858 = vunpack.c.h.b16 %v427
        %v859 = vunpack.c.l.b16 %v428
        %v860 = vunpack.c.h.b16 %v428
        %v861 = vunpack.c.l.b16 %v429
        %v862 = vunpack.c.h.b16 %v429
        %v863 = vunpack.c.l.b16 %v430
        %v864 = vunpack.c.h.b16 %v430
        %v865 = vunpack.c.l.b16 %v431
        %v866 = vunpack.c.h.b16 %v431
        %v867 = vunpack.c.l.b16 %v432
        %v868 = vunpack.c.h.b16 %v432
        %v869 = vunpack.c.l.b16 %v433
        %v870 = vunpack.c.h.b16 %v433
        %v871 = vunpack.c.l.b16 %v434
        %v872 = vunpack.c.h.b16 %v434
        %v873 = vunpack.c.l.b16 %v435
        %v874 = vunpack.c.h.b16 %v435
        %v875 = vunpack.c.l.b16 %v436
        %v876 = vunpack.c.h.b16 %v436
        %v877 = vunpack.c.l.b16 %v437
        %v878 = vunpack.c.h.b16 %v437
        %v879 = vunpack.c.l.b16 %v438
        %v880 = vunpack.c.h.b16 %v438
        %v881 = vunpack.c.l.b16 %v439
        %v882 = vunpack.c.h.b16 %v439
        %v883 = vunpack.c.l.b16 %v440
        %v884 = vunpack.c.h.b16 %v440
        %v885 = vunpack.c.l.b16 %v441
        %v886 = vunpack.c.h.b16 %v441
        %v887 = vunpack.c.l.b16 %v442
        %v888 = vunpack.c.h.b16 %v442
        %v889 = vunpack.c.l.b16 %v443
        %v890 = vunpack.c.h.b16 %v443
        %v891 = vunpack.c.l.b16 %v444
        %v892 = vunpack.c.h.b16 %v444
        %v893 = vunpack.c.l.b16 %v445
        %v894 = vunpack.c.h.b16 %v445
        %v895 = vunpack.c.l.b16 %v446
        %v896 = vunpack.c.h.b16 %v446
        %v897 = vunpack.c.l.b16 %v447
        %v898 = vunpack.c.h.b16 %v447
        %v899 = vunpack.c.l.b16 %v448
        %v900 = vunpack.c.h.b16 %v448
        %v901 = vunpack.c.l.b16 %v449
        %v902 = vunpack.c.h.b16 %v449
        %v903 = vunpack.c.l.b16 %v450
        %v904 = vunpack.c.h.b16 %v450
        %v905 = vunpack.c.l.b16 %v451
        %v906 = vunpack.c.h.b16 %v451
        %v907 = vunpack.c.l.b16 %v452
        %v908 = vunpack.c.h.b16 %v452
        %v909 = vunpack.c.l.b16 %v453
        %v910 = vunpack.c.h.b16 %v453
        %v911 = vunpack.c.l.b16 %v454
        %v912 = vunpack.c.h.b16 %v454
        %v913 = vunpack.c.l.b16 %v455
        %v914 = vunpack.c.h.b16 %v455
        %v915 = vunpack.c.l.b16 %v456
        %v916 = vunpack.c.h.b16 %v456
        %v917 = vunpack.c.l.b16 %v457
        %v918 = vunpack.c.h.b16 %v457
        %v919 = vunpack.c.l.b16 %v458
        %v920 = vunpack.c.h.b16 %v458
        %v921 = vunpack.c.l.b16 %v459
        %v922 = vunpack.c.h.b16 %v459
        %v923 = vunpack.c.l.b16 %v460
        %v924 = vunpack.c.h.b16 %v460
        %v925 = vpack.c.b16 %v677, %v669
        %v926 = vpack.c.b16 %v678, %v670
        %v927 = vpack.c.b16 %v679, %v671
        %v928 = vpack.c.b16 %v680, %v672
        %v929 = vpack.c.b16 %v681, %v673
        %v930 = vpack.c.b16 %v682, %v674
        %v931 = vpack.c.b16 %v683, %v675
        %v932 = vpack.c.b16 %v684, %v676
        %v933 = vpack.c.b16 %v693, %v685
        %v934 = vpack.c.b16 %v694, %v686
        %v935 = vpack.c.b16 %v695, %v687
        %v936 = vpack.c.b16 %v696, %v688
        %v937 = vpack.c.b16 %v697, %v689
        %v938 = vpack.c.b16 %v698, %v690
        %v939 = vpack.c.b16 %v699, %v691
        %v940 = vpack.c.b16 %v700, %v692
        %v941 = vpack.c.b16 %v709, %v701
        %v942 = vpack.c.b16 %v710, %v702
        %v943 = vpack.c.b16 %v711, %v703
        %v944 = vpack.c.b16 %v712, %v704
        %v945 = vpack.c.b16 %v713, %v705
        %v946 = vpack.c.b16 %v714, %v706
        %v947 = vpack.c.b16 %v715, %v707
        %v948 = vpack.c.b16 %v716, %v708
        %v949 = vpack.c.b16 %v725, %v717
        %v950 = vpack.c.b16 %v726, %v718
        %v951 = vpack.c.b16 %v727, %v719
        %v952 = vpack.c.b16 %v728, %v720
        %v953 = vpack.c.b16 %v729, %v721
        %v954 = vpack.c.b16 %v730, %v722
        %v955 = vpack.c.b16 %v731, %v723
        %v956 = vpack.c.b16 %v732, %v724
        %v957 = vpack.c.b16 %v741, %v733
        %v958 = vpack.c.b16 %v742, %v734
        %v959 = vpack.c.b16 %v743, %v735
        %v960 = vpack.c.b16 %v744, %v736
        %v961 = vpack.c.b16 %v745, %v737
        %v962 = vpack.c.b16 %v746, %v738
        %v963 = vpack.c.b16 %v747, %v739
        %v964 = vpack.c.b16 %v748, %v740
        %v965 = vpack.c.b16 %v757, %v749
        %v966 = vpack.c.b16 %v758, %v750
        %v967 = vpack.c.b16 %v759, %v751
        %v968 = vpack.c.b16 %v760, %v752
        %v969 = vpack.c.b16 %v761, %v753
        %v970 = vpack.c.b16 %v762, %v754
        %v971 = vpack.c.b16 %v763, %v755
        %v972 = vpack.c.b16 %v764, %v756
        %v973 = vpack.c.b16 %v773, %v765
        %v974 = vpack.c.b16 %v774, %v766
        %v975 = vpack.c.b16 %v775, %v767
        %v976 = vpack.c.b16 %v776, %v768
        %v977 = vpack.c.b16 %v777, %v769
        %v978 = vpack.c.b16 %v778, %v770
        %v979 = vpack.c.b16 %v779, %v771
        %v980 = vpack.c.b16 %v780, %v772
        %v981 = vpack.c.b16 %v789, %v781
        %v982 = vpack.c.b16 %v790, %v782
        %v983 = vpack.c.b16 %v791, %v783
        %v984 = vpack.c.b16 %v792, %v784
        %v985 = vpack.c.b16 %v793, %v785
        %v986 = vpack.c.b16 %v794, %v786
        %v987 = vpack.c.b16 %v795, %v787
        %v988 = vpack.c.b16 %v796, %v788
        %v989 = vpack.c.b16 %v805, %v797
        %v990 = vpack.c.b16 %v806, %v798
        %v991 = vpack.c.b16 %v807, %v799
        %v992 = vpack.c.b16 %v808, %v800
        %v993 = vpack.c.b16 %v809, %v801
        %v994 = vpack.c.b16 %v810, %v802
        %v995 = vpack.c.b16 %v811, %v803
        %v996 = vpack.c.b16 %v812, %v804
        %v997 = vpack.c.b16 %v821, %v813
        %v998 = vpack.c.b16 %v822, %v814
        %v999 = vpack.c.b16 %v823, %v815
        %v1000 = vpack.c.b16 %v824, %v816
        %v1001 = vpack.c.b16 %v825, %v817
        %v1002 = vpack.c.b16 %v826, %v818
        %v1003 = vpack.c.b16 %v827, %v819
        %v1004 = vpack.c.b16 %v828, %v820
        %v1005 = vpack.c.b16 %v837, %v829
        %v1006 = vpack.c.b16 %v838, %v830
        %v1007 = vpack.c.b16 %v839, %v831
        %v1008 = vpack.c.b16 %v840, %v832
        %v1009 = vpack.c.b16 %v841, %v833
        %v1010 = vpack.c.b16 %v842, %v834
        %v1011 = vpack.c.b16 %v843, %v835
        %v1012 = vpack.c.b16 %v844, %v836
        %v1013 = vpack.c.b16 %v853, %v845
        %v1014 = vpack.c.b16 %v854, %v846
        %v1015 = vpack.c.b16 %v855, %v847
        %v1016 = vpack.c.b16 %v856, %v848
        %v1017 = vpack.c.b16 %v857, %v849
        %v1018 = vpack.c.b16 %v858, %v850
        %v1019 = vpack.c.b16 %v859, %v851
        %v1020 = vpack.c.b16 %v860, %v852
        %v1021 = vpack.c.b16 %v869, %v861
        %v1022 = vpack.c.b16 %v870, %v862
        %v1023 = vpack.c.b16 %v871, %v863
        %v1024 = vpack.c.b16 %v872, %v864
        %v1025 = vpack.c.b16 %v873, %v865
        %v1026 = vpack.c.b16 %v874, %v866
        %v1027 = vpack.c.b16 %v875, %v867
        %v1028 = vpack.c.b16 %v876, %v868
        %v1029 = vpack.c.b16 %v885, %v877
        %v1030 = vpack.c.b16 %v886, %v878
        %v1031 = vpack.c.b16 %v887, %v879
        %v1032 = vpack.c.b16 %v888, %v880
        %v1033 = vpack.c.b16 %v889, %v881
        %v1034 = vpack.c.b16 %v890, %v882
        %v1035 = vpack.c.b16 %v891, %v883
        %v1036 = vpack.c.b16 %v892, %v884
        %v1037 = vpack.c.b16 %v901, %v893
        %v1038 = vpack.c.b16 %v902, %v894
        %v1039 = vpack.c.b16 %v903, %v895
        %v1040 = vpack.c.b16 %v904, %v896
        %v1041 = vpack.c.b16 %v905, %v897
        %v1042 = vpack.c.b16 %v906, %v898
        %v1043 = vpack.c.b16 %v907, %v899
        %v1044 = vpack.c.b16 %v908, %v900
        %v1045 = vpack.c.b16 %v917, %v909
        %v1046 = vpack.c.b16 %v918, %v910
        %v1047 = vpack.c.b16 %v919, %v911
        %v1048 = vpack.c.b16 %v920, %v912
        %v1049 = vpack.c.b16 %v921, %v913
        %v1050 = vpack.c.b16 %v922, %v914
        %v1051 = vpack.c.b16 %v923, %v915
        %v1052 = vpack.c.b16 %v924, %v916
        %1181 = vmatprep.subr.bf16.mxu0 %v926
        %1182 = vmatpush1.bf16.msra.mxu0 %v925
        %1183 = vmatprep.subr.bf16.mxu0 %v934
        %1184 = vmatpush1.bf16.msra.mxu0 %v933
        %1185 = vmatprep.subr.bf16.mxu0 %v942
        %1186 = vmatpush1.bf16.msra.mxu0 %v941
        %1187 = vmatprep.subr.bf16.mxu0 %v950
        %1188 = vmatpush1.bf16.msra.mxu0 %v949
        %1189 = vmatprep.subr.bf16.mxu0 %v958
        %1190 = vmatpush1.bf16.msra.mxu0 %v957
        %1191 = vmatprep.subr.bf16.mxu0 %v966
        %1192 = vmatpush1.bf16.msra.mxu0 %v965
        %1193 = vmatprep.subr.bf16.mxu0 %v974
        %1194 = vmatpush1.bf16.msra.mxu0 %v973
        %1195 = vmatprep.subr.bf16.mxu0 %v982
        %1196 = vmatpush1.bf16.msra.mxu0 %v981
        %1197 = vmatprep.subr.bf16.mxu0 %v990
        %1198 = vmatpush1.bf16.msra.mxu0 %v989
        %1199 = vmatprep.subr.bf16.mxu0 %v998
        %1200 = vmatpush1.bf16.msra.mxu0 %v997
        %1201 = vmatprep.subr.bf16.mxu0 %v1006
        %1202 = vmatpush1.bf16.msra.mxu0 %v1005
        %1203 = vmatprep.subr.bf16.mxu0 %v1014
        %1204 = vmatpush1.bf16.msra.mxu0 %v1013
        %1205 = vmatprep.subr.bf16.mxu0 %v1022
        %1206 = vmatpush1.bf16.msra.mxu0 %v1021
        %1207 = vmatprep.subr.bf16.mxu0 %v1030
        %1208 = vmatpush1.bf16.msra.mxu0 %v1029
        %1209 = vmatprep.subr.bf16.mxu0 %v1038
        %1210 = vmatpush1.bf16.msra.mxu0 %v1037
        %1211 = vmatprep.subr.bf16.mxu0 %v1046
        %1212 = vmatpush1.bf16.msra.mxu0 %v1045
        %1213 = vmatprep.mubr.bf16.mxu0 %v510
        %1214 = vmatmul.mubr.bf16.gmra.mrb[0].mxu0 %v509
        %v1215 = vpop.f32.mrb[0].mxu0
        %v1216 = vadd.f32 0.0, %v1215
        %v1217 = vpop.f32.mrb[0].mxu0
        %v1218 = vadd.f32 0.0, %v1217
        %v1219 = vpop.f32.mrb[0].mxu0
        %v1220 = vadd.f32 0.0, %v1219
        %v1221 = vpop.f32.mrb[0].mxu0
        %v1222 = vadd.f32 0.0, %v1221
        %1223 = vmatprep.mubr.bf16.mxu0 %v512
        %1224 = vmatmul.mubr.bf16.gmra.mrb[0].mxu0 %v511
        %v1225 = vpop.f32.mrb[0].mxu0
        %v1226 = vadd.f32 0.0, %v1225
        %v1227 = vpop.f32.mrb[0].mxu0
        %v1228 = vadd.f32 0.0, %v1227
        %v1229 = vpop.f32.mrb[0].mxu0
        %v1230 = vadd.f32 0.0, %v1229
        %v1231 = vpop.f32.mrb[0].mxu0
        %v1232 = vadd.f32 0.0, %v1231
        %1233 = vmatprep.mubr.bf16.mxu0 %v514
        %1234 = vmatmul.mubr.bf16.gmra.mrb[0].mxu0 %v513
        %v1235 = vpop.f32.mrb[0].mxu0
        %v1236 = vadd.f32 0.0, %v1235
        %v1237 = vpop.f32.mrb[0].mxu0
        %v1238 = vadd.f32 0.0, %v1237
        %v1239 = vpop.f32.mrb[0].mxu0
        %v1240 = vadd.f32 0.0, %v1239
        %v1241 = vpop.f32.mrb[0].mxu0
        %v1242 = vadd.f32 0.0, %v1241
        %1243 = vmatprep.mubr.bf16.mxu0 %v516
        %1244 = vmatmul.mubr.bf16.gmra.mrb[0].mxu0 %v515
        %v1245 = vpop.f32.mrb[0].mxu0
        %v1246 = vadd.f32 0.0, %v1245
        %v1247 = vpop.f32.mrb[0].mxu0
        %v1248 = vadd.f32 0.0, %v1247
        %v1249 = vpop.f32.mrb[0].mxu0
        %v1250 = vadd.f32 0.0, %v1249
        %v1251 = vpop.f32.mrb[0].mxu0
        %v1252 = vadd.f32 0.0, %v1251
        %1253 = vmatprep.mubr.bf16.mxu0 %v518
        %1254 = vmatmul.mubr.bf16.gmra.mrb[0].mxu0 %v517
        %v1255 = vpop.f32.mrb[0].mxu0
        %v1256 = vadd.f32 0.0, %v1255
        %v1257 = vpop.f32.mrb[0].mxu0
        %v1258 = vadd.f32 0.0, %v1257
        %v1259 = vpop.f32.mrb[0].mxu0
        %v1260 = vadd.f32 0.0, %v1259
        %v1261 = vpop.f32.mrb[0].mxu0
        %v1262 = vadd.f32 0.0, %v1261
        %1263 = vmatprep.mubr.bf16.mxu0 %v520
        %1264 = vmatmul.mubr.bf16.gmra.mrb[0].mxu0 %v519
        %v1265 = vpop.f32.mrb[0].mxu0
        %v1266 = vadd.f32 0.0, %v1265
        %v1267 = vpop.f32.mrb[0].mxu0
        %v1268 = vadd.f32 0.0, %v1267
        %v1269 = vpop.f32.mrb[0].mxu0
        %v1270 = vadd.f32 0.0, %v1269
        %v1271 = vpop.f32.mrb[0].mxu0
        %v1272 = vadd.f32 0.0, %v1271
        %1273 = vmatprep.mubr.bf16.mxu0 %v522
        %1274 = vmatmul.mubr.bf16.gmra.mrb[0].mxu0 %v521
        %v1275 = vpop.f32.mrb[0].mxu0
        %v1276 = vadd.f32 0.0, %v1275
        %v1277 = vpop.f32.mrb[0].mxu0
        %v1278 = vadd.f32 0.0, %v1277
        %v1279 = vpop.f32.mrb[0].mxu0
        %v1280 = vadd.f32 0.0, %v1279
        %v1281 = vpop.f32.mrb[0].mxu0
        %v1282 = vadd.f32 0.0, %v1281
        %1283 = vmatprep.mubr.bf16.mxu0 %v524
        %1284 = vmatmul.mubr.bf16.gmra.mrb[0].mxu0 %v523
        %v1285 = vpop.f32.mrb[0].mxu0
        %v1286 = vadd.f32 0.0, %v1285
        %v1287 = vpop.f32.mrb[0].mxu0
        %v1288 = vadd.f32 0.0, %v1287
        %v1289 = vpop.f32.mrb[0].mxu0
        %v1290 = vadd.f32 0.0, %v1289
        %v1291 = vpop.f32.mrb[0].mxu0
        %v1292 = vadd.f32 0.0, %v1291
        %1293 = vdwg.mxu0
        %1294 = vmatprep.subr.bf16.mxu0 %v928
        %1295 = vmatpush1.bf16.msra.mxu0 %v927
        %1296 = vmatprep.subr.bf16.mxu0 %v936
        %1297 = vmatpush1.bf16.msra.mxu0 %v935
        %1298 = vmatprep.subr.bf16.mxu0 %v944
        %1299 = vmatpush1.bf16.msra.mxu0 %v943
        %1300 = vmatprep.subr.bf16.mxu0 %v952
        %1301 = vmatpush1.bf16.msra.mxu0 %v951
        %1302 = vmatprep.subr.bf16.mxu0 %v960
        %1303 = vmatpush1.bf16.msra.mxu0 %v959
        %1304 = vmatprep.subr.bf16.mxu0 %v968
        %1305 = vmatpush1.bf16.msra.mxu0 %v967
        %1306 = vmatprep.subr.bf16.mxu0 %v976
        %1307 = vmatpush1.bf16.msra.mxu0 %v975
        %1308 = vmatprep.subr.bf16.mxu0 %v984
        %1309 = vmatpush1.bf16.msra.mxu0 %v983
        %1310 = vmatprep.subr.bf16.mxu0 %v992
        %1311 = vmatpush1.bf16.msra.mxu0 %v991
        %1312 = vmatprep.subr.bf16.mxu0 %v1000
        %1313 = vmatpush1.bf16.msra.mxu0 %v999
        %1314 = vmatprep.subr.bf16.mxu0 %v1008
        %1315 = vmatpush1.bf16.msra.mxu0 %v1007
        %1316 = vmatprep.subr.bf16.mxu0 %v1016
        %1317 = vmatpush1.bf16.msra.mxu0 %v1015
        %1318 = vmatprep.subr.bf16.mxu0 %v1024
        %1319 = vmatpush1.bf16.msra.mxu0 %v1023
        %1320 = vmatprep.subr.bf16.mxu0 %v1032
        %1321 = vmatpush1.bf16.msra.mxu0 %v1031
        %1322 = vmatprep.subr.bf16.mxu0 %v1040
        %1323 = vmatpush1.bf16.msra.mxu0 %v1039
        %1324 = vmatprep.subr.bf16.mxu0 %v1048
        %1325 = vmatpush1.bf16.msra.mxu0 %v1047
        %1326 = vmatprep.mubr.bf16.mxu0 %v510
        %1327 = vmatmul.mubr.bf16.gmra.mrb[0].mxu0 %v509
        %v1328 = vpop.f32.mrb[0].mxu0
        %v1329 = vadd.f32 0.0, %v1328
        %v1330 = vpop.f32.mrb[0].mxu0
        %v1331 = vadd.f32 0.0, %v1330
        %v1332 = vpop.f32.mrb[0].mxu0
        %v1333 = vadd.f32 0.0, %v1332
        %v1334 = vpop.f32.mrb[0].mxu0
        %v1335 = vadd.f32 0.0, %v1334
        %1336 = vmatprep.mubr.bf16.mxu0 %v512
        %1337 = vmatmul.mubr.bf16.gmra.mrb[0].mxu0 %v511
        %v1338 = vpop.f32.mrb[0].mxu0
        %v1339 = vadd.f32 0.0, %v1338
        %v1340 = vpop.f32.mrb[0].mxu0
        %v1341 = vadd.f32 0.0, %v1340
        %v1342 = vpop.f32.mrb[0].mxu0
        %v1343 = vadd.f32 0.0, %v1342
        %v1344 = vpop.f32.mrb[0].mxu0
        %v1345 = vadd.f32 0.0, %v1344
        %1346 = vmatprep.mubr.bf16.mxu0 %v514
        %1347 = vmatmul.mubr.bf16.gmra.mrb[0].mxu0 %v513
        %v1348 = vpop.f32.mrb[0].mxu0
        %v1349 = vadd.f32 0.0, %v1348
        %v1350 = vpop.f32.mrb[0].mxu0
        %v1351 = vadd.f32 0.0, %v1350
        %v1352 = vpop.f32.mrb[0].mxu0
        %v1353 = vadd.f32 0.0, %v1352
        %v1354 = vpop.f32.mrb[0].mxu0
        %v1355 = vadd.f32 0.0, %v1354
        %1356 = vmatprep.mubr.bf16.mxu0 %v516
        %1357 = vmatmul.mubr.bf16.gmra.mrb[0].mxu0 %v515
        %v1358 = vpop.f32.mrb[0].mxu0
        %v1359 = vadd.f32 0.0, %v1358
        %v1360 = vpop.f32.mrb[0].mxu0
        %v1361 = vadd.f32 0.0, %v1360
        %v1362 = vpop.f32.mrb[0].mxu0
        %v1363 = vadd.f32 0.0, %v1362
        %v1364 = vpop.f32.mrb[0].mxu0
        %v1365 = vadd.f32 0.0, %v1364
        %1366 = vmatprep.mubr.bf16.mxu0 %v518
        %1367 = vmatmul.mubr.bf16.gmra.mrb[0].mxu0 %v517
        %v1368 = vpop.f32.mrb[0].mxu0
        %v1369 = vadd.f32 0.0, %v1368
        %v1370 = vpop.f32.mrb[0].mxu0
        %v1371 = vadd.f32 0.0, %v1370
        %v1372 = vpop.f32.mrb[0].mxu0
        %v1373 = vadd.f32 0.0, %v1372
        %v1374 = vpop.f32.mrb[0].mxu0
        %v1375 = vadd.f32 0.0, %v1374
        %1376 = vmatprep.mubr.bf16.mxu0 %v520
        %1377 = vmatmul.mubr.bf16.gmra.mrb[0].mxu0 %v519
        %v1378 = vpop.f32.mrb[0].mxu0
        %v1379 = vadd.f32 0.0, %v1378
        %v1380 = vpop.f32.mrb[0].mxu0
        %v1381 = vadd.f32 0.0, %v1380
        %v1382 = vpop.f32.mrb[0].mxu0
        %v1383 = vadd.f32 0.0, %v1382
        %v1384 = vpop.f32.mrb[0].mxu0
        %v1385 = vadd.f32 0.0, %v1384
        %1386 = vmatprep.mubr.bf16.mxu0 %v522
        %1387 = vmatmul.mubr.bf16.gmra.mrb[0].mxu0 %v521
        %v1388 = vpop.f32.mrb[0].mxu0
        %v1389 = vadd.f32 0.0, %v1388
        %v1390 = vpop.f32.mrb[0].mxu0
        %v1391 = vadd.f32 0.0, %v1390
        %v1392 = vpop.f32.mrb[0].mxu0
        %v1393 = vadd.f32 0.0, %v1392
        %v1394 = vpop.f32.mrb[0].mxu0
        %v1395 = vadd.f32 0.0, %v1394
        %1396 = vmatprep.mubr.bf16.mxu0 %v524
        %1397 = vmatmul.mubr.bf16.gmra.mrb[0].mxu0 %v523
        %v1398 = vpop.f32.mrb[0].mxu0
        %v1399 = vadd.f32 0.0, %v1398
        %v1400 = vpop.f32.mrb[0].mxu0
        %v1401 = vadd.f32 0.0, %v1400
        %v1402 = vpop.f32.mrb[0].mxu0
        %v1403 = vadd.f32 0.0, %v1402
        %v1404 = vpop.f32.mrb[0].mxu0
        %v1405 = vadd.f32 0.0, %v1404
        %1406 = vdwg.mxu0
        %1407 = vmatprep.subr.bf16.mxu0 %v930
        %1408 = vmatpush1.bf16.msra.mxu0 %v929
        %1409 = vmatprep.subr.bf16.mxu0 %v938
        %1410 = vmatpush1.bf16.msra.mxu0 %v937
        %1411 = vmatprep.subr.bf16.mxu0 %v946
        %1412 = vmatpush1.bf16.msra.mxu0 %v945
        %1413 = vmatprep.subr.bf16.mxu0 %v954
        %1414 = vmatpush1.bf16.msra.mxu0 %v953
        %1415 = vmatprep.subr.bf16.mxu0 %v962
        %1416 = vmatpush1.bf16.msra.mxu0 %v961
        %1417 = vmatprep.subr.bf16.mxu0 %v970
        %1418 = vmatpush1.bf16.msra.mxu0 %v969
        %1419 = vmatprep.subr.bf16.mxu0 %v978
        %1420 = vmatpush1.bf16.msra.mxu0 %v977
        %1421 = vmatprep.subr.bf16.mxu0 %v986
        %1422 = vmatpush1.bf16.msra.mxu0 %v985
        %1423 = vmatprep.subr.bf16.mxu0 %v994
        %1424 = vmatpush1.bf16.msra.mxu0 %v993
        %1425 = vmatprep.subr.bf16.mxu0 %v1002
        %1426 = vmatpush1.bf16.msra.mxu0 %v1001
        %1427 = vmatprep.subr.bf16.mxu0 %v1010
        %1428 = vmatpush1.bf16.msra.mxu0 %v1009
        %1429 = vmatprep.subr.bf16.mxu0 %v1018
        %1430 = vmatpush1.bf16.msra.mxu0 %v1017
        %1431 = vmatprep.subr.bf16.mxu0 %v1026
        %1432 = vmatpush1.bf16.msra.mxu0 %v1025
        %1433 = vmatprep.subr.bf16.mxu0 %v1034
        %1434 = vmatpush1.bf16.msra.mxu0 %v1033
        %1435 = vmatprep.subr.bf16.mxu0 %v1042
        %1436 = vmatpush1.bf16.msra.mxu0 %v1041
        %1437 = vmatprep.subr.bf16.mxu0 %v1050
        %1438 = vmatpush1.bf16.msra.mxu0 %v1049
        %1439 = vmatprep.mubr.bf16.mxu0 %v510
        %1440 = vmatmul.mubr.bf16.gmra.mrb[0].mxu0 %v509
        %v1441 = vpop.f32.mrb[0].mxu0
        %v1442 = vadd.f32 0.0, %v1441
        %v1443 = vpop.f32.mrb[0].mxu0
        %v1444 = vadd.f32 0.0, %v1443
        %v1445 = vpop.f32.mrb[0].mxu0
        %v1446 = vadd.f32 0.0, %v1445
        %v1447 = vpop.f32.mrb[0].mxu0
        %v1448 = vadd.f32 0.0, %v1447
        %1449 = vmatprep.mubr.bf16.mxu0 %v512
        %1450 = vmatmul.mubr.bf16.gmra.mrb[0].mxu0 %v511
        %v1451 = vpop.f32.mrb[0].mxu0
        %v1452 = vadd.f32 0.0, %v1451
        %v1453 = vpop.f32.mrb[0].mxu0
        %v1454 = vadd.f32 0.0, %v1453
        %v1455 = vpop.f32.mrb[0].mxu0
        %v1456 = vadd.f32 0.0, %v1455
        %v1457 = vpop.f32.mrb[0].mxu0
        %v1458 = vadd.f32 0.0, %v1457
        %1459 = vmatprep.mubr.bf16.mxu0 %v514
        %1460 = vmatmul.mubr.bf16.gmra.mrb[0].mxu0 %v513
        %v1461 = vpop.f32.mrb[0].mxu0
        %v1462 = vadd.f32 0.0, %v1461
        %v1463 = vpop.f32.mrb[0].mxu0
        %v1464 = vadd.f32 0.0, %v1463
        %v1465 = vpop.f32.mrb[0].mxu0
        %v1466 = vadd.f32 0.0, %v1465
        %v1467 = vpop.f32.mrb[0].mxu0
        %v1468 = vadd.f32 0.0, %v1467
        %1469 = vmatprep.mubr.bf16.mxu0 %v516
        %1470 = vmatmul.mubr.bf16.gmra.mrb[0].mxu0 %v515
        %v1471 = vpop.f32.mrb[0].mxu0
        %v1472 = vadd.f32 0.0, %v1471
        %v1473 = vpop.f32.mrb[0].mxu0
        %v1474 = vadd.f32 0.0, %v1473
        %v1475 = vpop.f32.mrb[0].mxu0
        %v1476 = vadd.f32 0.0, %v1475
        %v1477 = vpop.f32.mrb[0].mxu0
        %v1478 = vadd.f32 0.0, %v1477
        %1479 = vmatprep.mubr.bf16.mxu0 %v518
        %1480 = vmatmul.mubr.bf16.gmra.mrb[0].mxu0 %v517
        %v1481 = vpop.f32.mrb[0].mxu0
        %v1482 = vadd.f32 0.0, %v1481
        %v1483 = vpop.f32.mrb[0].mxu0
        %v1484 = vadd.f32 0.0, %v1483
        %v1485 = vpop.f32.mrb[0].mxu0
        %v1486 = vadd.f32 0.0, %v1485
        %v1487 = vpop.f32.mrb[0].mxu0
        %v1488 = vadd.f32 0.0, %v1487
        %1489 = vmatprep.mubr.bf16.mxu0 %v520
        %1490 = vmatmul.mubr.bf16.gmra.mrb[0].mxu0 %v519
        %v1491 = vpop.f32.mrb[0].mxu0
        %v1492 = vadd.f32 0.0, %v1491
        %v1493 = vpop.f32.mrb[0].mxu0
        %v1494 = vadd.f32 0.0, %v1493
        %v1495 = vpop.f32.mrb[0].mxu0
        %v1496 = vadd.f32 0.0, %v1495
        %v1497 = vpop.f32.mrb[0].mxu0
        %v1498 = vadd.f32 0.0, %v1497
        %1499 = vmatprep.mubr.bf16.mxu0 %v522
        %1500 = vmatmul.mubr.bf16.gmra.mrb[0].mxu0 %v521
        %v1501 = vpop.f32.mrb[0].mxu0
        %v1502 = vadd.f32 0.0, %v1501
        %v1503 = vpop.f32.mrb[0].mxu0
        %v1504 = vadd.f32 0.0, %v1503
        %v1505 = vpop.f32.mrb[0].mxu0
        %v1506 = vadd.f32 0.0, %v1505
        %v1507 = vpop.f32.mrb[0].mxu0
        %v1508 = vadd.f32 0.0, %v1507
        %1509 = vmatprep.mubr.bf16.mxu0 %v524
        %1510 = vmatmul.mubr.bf16.gmra.mrb[0].mxu0 %v523
        %v1511 = vpop.f32.mrb[0].mxu0
        %v1512 = vadd.f32 0.0, %v1511
        %v1513 = vpop.f32.mrb[0].mxu0
        %v1514 = vadd.f32 0.0, %v1513
        %v1515 = vpop.f32.mrb[0].mxu0
        %v1516 = vadd.f32 0.0, %v1515
        %v1517 = vpop.f32.mrb[0].mxu0
        %v1518 = vadd.f32 0.0, %v1517
        %1519 = vdwg.mxu0
        %1520 = vmatprep.subr.bf16.mxu0 %v932
        %1521 = vmatpush1.bf16.msra.mxu0 %v931
        %1522 = vmatprep.subr.bf16.mxu0 %v940
        %1523 = vmatpush1.bf16.msra.mxu0 %v939
        %1524 = vmatprep.subr.bf16.mxu0 %v948
        %1525 = vmatpush1.bf16.msra.mxu0 %v947
        %1526 = vmatprep.subr.bf16.mxu0 %v956
        %1527 = vmatpush1.bf16.msra.mxu0 %v955
        %1528 = vmatprep.subr.bf16.mxu0 %v964
        %1529 = vmatpush1.bf16.msra.mxu0 %v963
        %1530 = vmatprep.subr.bf16.mxu0 %v972
        %1531 = vmatpush1.bf16.msra.mxu0 %v971
        %1532 = vmatprep.subr.bf16.mxu0 %v980
        %1533 = vmatpush1.bf16.msra.mxu0 %v979
        %1534 = vmatprep.subr.bf16.mxu0 %v988
        %1535 = vmatpush1.bf16.msra.mxu0 %v987
        %1536 = vmatprep.subr.bf16.mxu0 %v996
        %1537 = vmatpush1.bf16.msra.mxu0 %v995
        %1538 = vmatprep.subr.bf16.mxu0 %v1004
        %1539 = vmatpush1.bf16.msra.mxu0 %v1003
        %1540 = vmatprep.subr.bf16.mxu0 %v1012
        %1541 = vmatpush1.bf16.msra.mxu0 %v1011
        %1542 = vmatprep.subr.bf16.mxu0 %v1020
        %1543 = vmatpush1.bf16.msra.mxu0 %v1019
        %1544 = vmatprep.subr.bf16.mxu0 %v1028
        %1545 = vmatpush1.bf16.msra.mxu0 %v1027
        %1546 = vmatprep.subr.bf16.mxu0 %v1036
        %1547 = vmatpush1.bf16.msra.mxu0 %v1035
        %1548 = vmatprep.subr.bf16.mxu0 %v1044
        %1549 = vmatpush1.bf16.msra.mxu0 %v1043
        %1550 = vmatprep.subr.bf16.mxu0 %v1052
        %1551 = vmatpush1.bf16.msra.mxu0 %v1051
        %1552 = vmatprep.mubr.bf16.mxu0 %v510
        %1553 = vmatmul.mubr.bf16.gmra.mrb[0].mxu0 %v509
        %v1554 = vpop.f32.mrb[0].mxu0
        %v1555 = vadd.f32 0.0, %v1554
        %v1556 = vpop.f32.mrb[0].mxu0
        %v1557 = vadd.f32 0.0, %v1556
        %v1558 = vpop.f32.mrb[0].mxu0
        %v1559 = vadd.f32 0.0, %v1558
        %v1560 = vpop.f32.mrb[0].mxu0
        %v1561 = vadd.f32 0.0, %v1560
        %1562 = vmatprep.mubr.bf16.mxu0 %v512
        %1563 = vmatmul.mubr.bf16.gmra.mrb[0].mxu0 %v511
        %v1564 = vpop.f32.mrb[0].mxu0
        %v1565 = vadd.f32 0.0, %v1564
        %v1566 = vpop.f32.mrb[0].mxu0
        %v1567 = vadd.f32 0.0, %v1566
        %v1568 = vpop.f32.mrb[0].mxu0
        %v1569 = vadd.f32 0.0, %v1568
        %v1570 = vpop.f32.mrb[0].mxu0
        %v1571 = vadd.f32 0.0, %v1570
        %1572 = vmatprep.mubr.bf16.mxu0 %v514
        %1573 = vmatmul.mubr.bf16.gmra.mrb[0].mxu0 %v513
        %v1574 = vpop.f32.mrb[0].mxu0
        %v1575 = vadd.f32 0.0, %v1574
        %v1576 = vpop.f32.mrb[0].mxu0
        %v1577 = vadd.f32 0.0, %v1576
        %v1578 = vpop.f32.mrb[0].mxu0
        %v1579 = vadd.f32 0.0, %v1578
        %v1580 = vpop.f32.mrb[0].mxu0
        %v1581 = vadd.f32 0.0, %v1580
        %1582 = vmatprep.mubr.bf16.mxu0 %v516
        %1583 = vmatmul.mubr.bf16.gmra.mrb[0].mxu0 %v515
        %v1584 = vpop.f32.mrb[0].mxu0
        %v1585 = vadd.f32 0.0, %v1584
        %v1586 = vpop.f32.mrb[0].mxu0
        %v1587 = vadd.f32 0.0, %v1586
        %v1588 = vpop.f32.mrb[0].mxu0
        %v1589 = vadd.f32 0.0, %v1588
        %v1590 = vpop.f32.mrb[0].mxu0
        %v1591 = vadd.f32 0.0, %v1590
        %1592 = vmatprep.mubr.bf16.mxu0 %v518
        %1593 = vmatmul.mubr.bf16.gmra.mrb[0].mxu0 %v517
        %v1594 = vpop.f32.mrb[0].mxu0
        %v1595 = vadd.f32 0.0, %v1594
        %v1596 = vpop.f32.mrb[0].mxu0
        %v1597 = vadd.f32 0.0, %v1596
        %v1598 = vpop.f32.mrb[0].mxu0
        %v1599 = vadd.f32 0.0, %v1598
        %v1600 = vpop.f32.mrb[0].mxu0
        %v1601 = vadd.f32 0.0, %v1600
        %1602 = vmatprep.mubr.bf16.mxu0 %v520
        %1603 = vmatmul.mubr.bf16.gmra.mrb[0].mxu0 %v519
        %v1604 = vpop.f32.mrb[0].mxu0
        %v1605 = vadd.f32 0.0, %v1604
        %v1606 = vpop.f32.mrb[0].mxu0
        %v1607 = vadd.f32 0.0, %v1606
        %v1608 = vpop.f32.mrb[0].mxu0
        %v1609 = vadd.f32 0.0, %v1608
        %v1610 = vpop.f32.mrb[0].mxu0
        %v1611 = vadd.f32 0.0, %v1610
        %1612 = vmatprep.mubr.bf16.mxu0 %v522
        %1613 = vmatmul.mubr.bf16.gmra.mrb[0].mxu0 %v521
        %v1614 = vpop.f32.mrb[0].mxu0
        %v1615 = vadd.f32 0.0, %v1614
        %v1616 = vpop.f32.mrb[0].mxu0
        %v1617 = vadd.f32 0.0, %v1616
        %v1618 = vpop.f32.mrb[0].mxu0
        %v1619 = vadd.f32 0.0, %v1618
        %v1620 = vpop.f32.mrb[0].mxu0
        %v1621 = vadd.f32 0.0, %v1620
        %1622 = vmatprep.mubr.bf16.mxu0 %v524
        %1623 = vmatmul.mubr.bf16.gmra.mrb[0].mxu0 %v523
        %v1624 = vpop.f32.mrb[0].mxu0
        %v1625 = vadd.f32 0.0, %v1624
        %v1626 = vpop.f32.mrb[0].mxu0
        %v1627 = vadd.f32 0.0, %v1626
        %v1628 = vpop.f32.mrb[0].mxu0
        %v1629 = vadd.f32 0.0, %v1628
        %v1630 = vpop.f32.mrb[0].mxu0
        %v1631 = vadd.f32 0.0, %v1630
        %1632 = vdwg.mxu0
        %v1633 = vmul.f32 %v1216, 0.044715
        %v1634 = vmul.f32 %v1218, 0.044715
        %v1635 = vmul.f32 %v1329, 0.044715
        %v1636 = vmul.f32 %v1331, 0.044715
        %v1637 = vmul.f32 %v1220, 0.044715
        %v1638 = vmul.f32 %v1222, 0.044715
        %v1639 = vmul.f32 %v1333, 0.044715
        %v1640 = vmul.f32 %v1335, 0.044715
        %v1641 = vmul.f32 %v1226, 0.044715
        %v1642 = vmul.f32 %v1228, 0.044715
        %v1643 = vmul.f32 %v1339, 0.044715
        %v1644 = vmul.f32 %v1341, 0.044715
        %v1645 = vmul.f32 %v1230, 0.044715
        %v1646 = vmul.f32 %v1232, 0.044715
        %v1647 = vmul.f32 %v1343, 0.044715
        %v1648 = vmul.f32 %v1345, 0.044715
        %v1649 = vmul.f32 %v1236, 0.044715
        %v1650 = vmul.f32 %v1238, 0.044715
        %v1651 = vmul.f32 %v1349, 0.044715
        %v1652 = vmul.f32 %v1351, 0.044715
        %v1653 = vmul.f32 %v1240, 0.044715
        %v1654 = vmul.f32 %v1242, 0.044715
        %v1655 = vmul.f32 %v1353, 0.044715
        %v1656 = vmul.f32 %v1355, 0.044715
        %v1657 = vmul.f32 %v1246, 0.044715
        %v1658 = vmul.f32 %v1248, 0.044715
        %v1659 = vmul.f32 %v1359, 0.044715
        %v1660 = vmul.f32 %v1361, 0.044715
        %v1661 = vmul.f32 %v1250, 0.044715
        %v1662 = vmul.f32 %v1252, 0.044715
        %v1663 = vmul.f32 %v1363, 0.044715
        %v1664 = vmul.f32 %v1365, 0.044715
        %v1665 = vmul.f32 %v1256, 0.044715
        %v1666 = vmul.f32 %v1258, 0.044715
        %v1667 = vmul.f32 %v1369, 0.044715
        %v1668 = vmul.f32 %v1371, 0.044715
        %v1669 = vmul.f32 %v1260, 0.044715
        %v1670 = vmul.f32 %v1262, 0.044715
        %v1671 = vmul.f32 %v1373, 0.044715
        %v1672 = vmul.f32 %v1375, 0.044715
        %v1673 = vmul.f32 %v1266, 0.044715
        %v1674 = vmul.f32 %v1268, 0.044715
        %v1675 = vmul.f32 %v1379, 0.044715
        %v1676 = vmul.f32 %v1381, 0.044715
        %v1677 = vmul.f32 %v1270, 0.044715
        %v1678 = vmul.f32 %v1272, 0.044715
        %v1679 = vmul.f32 %v1383, 0.044715
        %v1680 = vmul.f32 %v1385, 0.044715
        %v1681 = vmul.f32 %v1276, 0.044715
        %v1682 = vmul.f32 %v1278, 0.044715
        %v1683 = vmul.f32 %v1389, 0.044715
        %v1684 = vmul.f32 %v1391, 0.044715
        %v1685 = vmul.f32 %v1280, 0.044715
        %v1686 = vmul.f32 %v1282, 0.044715
        %v1687 = vmul.f32 %v1393, 0.044715
        %v1688 = vmul.f32 %v1395, 0.044715
        %v1689 = vmul.f32 %v1286, 0.044715
        %v1690 = vmul.f32 %v1288, 0.044715
        %v1691 = vmul.f32 %v1399, 0.044715
        %v1692 = vmul.f32 %v1401, 0.044715
        %v1693 = vmul.f32 %v1290, 0.044715
        %v1694 = vmul.f32 %v1292, 0.044715
        %v1695 = vmul.f32 %v1403, 0.044715
        %v1696 = vmul.f32 %v1405, 0.044715
        %v1697 = vmul.f32 %v1633, %v1216
        %v1698 = vmul.f32 %v1634, %v1218
        %v1699 = vmul.f32 %v1635, %v1329
        %v1700 = vmul.f32 %v1636, %v1331
        %v1701 = vmul.f32 %v1637, %v1220
        %v1702 = vmul.f32 %v1638, %v1222
        %v1703 = vmul.f32 %v1639, %v1333
        %v1704 = vmul.f32 %v1640, %v1335
        %v1705 = vmul.f32 %v1641, %v1226
        %v1706 = vmul.f32 %v1642, %v1228
        %v1707 = vmul.f32 %v1643, %v1339
        %v1708 = vmul.f32 %v1644, %v1341
        %v1709 = vmul.f32 %v1645, %v1230
        %v1710 = vmul.f32 %v1646, %v1232
        %v1711 = vmul.f32 %v1647, %v1343
        %v1712 = vmul.f32 %v1648, %v1345
        %v1713 = vmul.f32 %v1649, %v1236
        %v1714 = vmul.f32 %v1650, %v1238
        %v1715 = vmul.f32 %v1651, %v1349
        %v1716 = vmul.f32 %v1652, %v1351
        %v1717 = vmul.f32 %v1653, %v1240
        %v1718 = vmul.f32 %v1654, %v1242
        %v1719 = vmul.f32 %v1655, %v1353
        %v1720 = vmul.f32 %v1656, %v1355
        %v1721 = vmul.f32 %v1657, %v1246
        %v1722 = vmul.f32 %v1658, %v1248
        %v1723 = vmul.f32 %v1659, %v1359
        %v1724 = vmul.f32 %v1660, %v1361
        %v1725 = vmul.f32 %v1661, %v1250
        %v1726 = vmul.f32 %v1662, %v1252
        %v1727 = vmul.f32 %v1663, %v1363
        %v1728 = vmul.f32 %v1664, %v1365
        %v1729 = vmul.f32 %v1665, %v1256
        %v1730 = vmul.f32 %v1666, %v1258
        %v1731 = vmul.f32 %v1667, %v1369
        %v1732 = vmul.f32 %v1668, %v1371
        %v1733 = vmul.f32 %v1669, %v1260
        %v1734 = vmul.f32 %v1670, %v1262
        %v1735 = vmul.f32 %v1671, %v1373
        %v1736 = vmul.f32 %v1672, %v1375
        %v1737 = vmul.f32 %v1673, %v1266
        %v1738 = vmul.f32 %v1674, %v1268
        %v1739 = vmul.f32 %v1675, %v1379
        %v1740 = vmul.f32 %v1676, %v1381
        %v1741 = vmul.f32 %v1677, %v1270
        %v1742 = vmul.f32 %v1678, %v1272
        %v1743 = vmul.f32 %v1679, %v1383
        %v1744 = vmul.f32 %v1680, %v1385
        %v1745 = vmul.f32 %v1681, %v1276
        %v1746 = vmul.f32 %v1682, %v1278
        %v1747 = vmul.f32 %v1683, %v1389
        %v1748 = vmul.f32 %v1684, %v1391
        %v1749 = vmul.f32 %v1685, %v1280
        %v1750 = vmul.f32 %v1686, %v1282
        %v1751 = vmul.f32 %v1687, %v1393
        %v1752 = vmul.f32 %v1688, %v1395
        %v1753 = vmul.f32 %v1689, %v1286
        %v1754 = vmul.f32 %v1690, %v1288
        %v1755 = vmul.f32 %v1691, %v1399
        %v1756 = vmul.f32 %v1692, %v1401
        %v1757 = vmul.f32 %v1693, %v1290
        %v1758 = vmul.f32 %v1694, %v1292
        %v1759 = vmul.f32 %v1695, %v1403
        %v1760 = vmul.f32 %v1696, %v1405
        %v1761 = vmul.f32 %v1697, %v1216
        %v1762 = vmul.f32 %v1698, %v1218
        %v1763 = vmul.f32 %v1699, %v1329
        %v1764 = vmul.f32 %v1700, %v1331
        %v1765 = vmul.f32 %v1701, %v1220
        %v1766 = vmul.f32 %v1702, %v1222
        %v1767 = vmul.f32 %v1703, %v1333
        %v1768 = vmul.f32 %v1704, %v1335
        %v1769 = vmul.f32 %v1705, %v1226
        %v1770 = vmul.f32 %v1706, %v1228
        %v1771 = vmul.f32 %v1707, %v1339
        %v1772 = vmul.f32 %v1708, %v1341
        %v1773 = vmul.f32 %v1709, %v1230
        %v1774 = vmul.f32 %v1710, %v1232
        %v1775 = vmul.f32 %v1711, %v1343
        %v1776 = vmul.f32 %v1712, %v1345
        %v1777 = vmul.f32 %v1713, %v1236
        %v1778 = vmul.f32 %v1714, %v1238
        %v1779 = vmul.f32 %v1715, %v1349
        %v1780 = vmul.f32 %v1716, %v1351
        %v1781 = vmul.f32 %v1717, %v1240
        %v1782 = vmul.f32 %v1718, %v1242
        %v1783 = vmul.f32 %v1719, %v1353
        %v1784 = vmul.f32 %v1720, %v1355
        %v1785 = vmul.f32 %v1721, %v1246
        %v1786 = vmul.f32 %v1722, %v1248
        %v1787 = vmul.f32 %v1723, %v1359
        %v1788 = vmul.f32 %v1724, %v1361
        %v1789 = vmul.f32 %v1725, %v1250
        %v1790 = vmul.f32 %v1726, %v1252
        %v1791 = vmul.f32 %v1727, %v1363
        %v1792 = vmul.f32 %v1728, %v1365
        %v1793 = vmul.f32 %v1729, %v1256
        %v1794 = vmul.f32 %v1730, %v1258
        %v1795 = vmul.f32 %v1731, %v1369
        %v1796 = vmul.f32 %v1732, %v1371
        %v1797 = vmul.f32 %v1733, %v1260
        %v1798 = vmul.f32 %v1734, %v1262
        %v1799 = vmul.f32 %v1735, %v1373
        %v1800 = vmul.f32 %v1736, %v1375
        %v1801 = vmul.f32 %v1737, %v1266
        %v1802 = vmul.f32 %v1738, %v1268
        %v1803 = vmul.f32 %v1739, %v1379
        %v1804 = vmul.f32 %v1740, %v1381
        %v1805 = vmul.f32 %v1741, %v1270
        %v1806 = vmul.f32 %v1742, %v1272
        %v1807 = vmul.f32 %v1743, %v1383
        %v1808 = vmul.f32 %v1744, %v1385
        %v1809 = vmul.f32 %v1745, %v1276
        %v1810 = vmul.f32 %v1746, %v1278
        %v1811 = vmul.f32 %v1747, %v1389
        %v1812 = vmul.f32 %v1748, %v1391
        %v1813 = vmul.f32 %v1749, %v1280
        %v1814 = vmul.f32 %v1750, %v1282
        %v1815 = vmul.f32 %v1751, %v1393
        %v1816 = vmul.f32 %v1752, %v1395
        %v1817 = vmul.f32 %v1753, %v1286
        %v1818 = vmul.f32 %v1754, %v1288
        %v1819 = vmul.f32 %v1755, %v1399
        %v1820 = vmul.f32 %v1756, %v1401
        %v1821 = vmul.f32 %v1757, %v1290
        %v1822 = vmul.f32 %v1758, %v1292
        %v1823 = vmul.f32 %v1759, %v1403
        %v1824 = vmul.f32 %v1760, %v1405
        %v1825 = vadd.f32 %v1216, %v1761
        %v1826 = vadd.f32 %v1218, %v1762
        %v1827 = vadd.f32 %v1329, %v1763
        %v1828 = vadd.f32 %v1331, %v1764
        %v1829 = vadd.f32 %v1220, %v1765
        %v1830 = vadd.f32 %v1222, %v1766
        %v1831 = vadd.f32 %v1333, %v1767
        %v1832 = vadd.f32 %v1335, %v1768
        %v1833 = vadd.f32 %v1226, %v1769
        %v1834 = vadd.f32 %v1228, %v1770
        %v1835 = vadd.f32 %v1339, %v1771
        %v1836 = vadd.f32 %v1341, %v1772
        %v1837 = vadd.f32 %v1230, %v1773
        %v1838 = vadd.f32 %v1232, %v1774
        %v1839 = vadd.f32 %v1343, %v1775
        %v1840 = vadd.f32 %v1345, %v1776
        %v1841 = vadd.f32 %v1236, %v1777
        %v1842 = vadd.f32 %v1238, %v1778
        %v1843 = vadd.f32 %v1349, %v1779
        %v1844 = vadd.f32 %v1351, %v1780
        %v1845 = vadd.f32 %v1240, %v1781
        %v1846 = vadd.f32 %v1242, %v1782
        %v1847 = vadd.f32 %v1353, %v1783
        %v1848 = vadd.f32 %v1355, %v1784
        %v1849 = vadd.f32 %v1246, %v1785
        %v1850 = vadd.f32 %v1248, %v1786
        %v1851 = vadd.f32 %v1359, %v1787
        %v1852 = vadd.f32 %v1361, %v1788
        %v1853 = vadd.f32 %v1250, %v1789
        %v1854 = vadd.f32 %v1252, %v1790
        %v1855 = vadd.f32 %v1363, %v1791
        %v1856 = vadd.f32 %v1365, %v1792
        %v1857 = vadd.f32 %v1256, %v1793
        %v1858 = vadd.f32 %v1258, %v1794
        %v1859 = vadd.f32 %v1369, %v1795
        %v1860 = vadd.f32 %v1371, %v1796
        %v1861 = vadd.f32 %v1260, %v1797
        %v1862 = vadd.f32 %v1262, %v1798
        %v1863 = vadd.f32 %v1373, %v1799
        %v1864 = vadd.f32 %v1375, %v1800
        %v1865 = vadd.f32 %v1266, %v1801
        %v1866 = vadd.f32 %v1268, %v1802
        %v1867 = vadd.f32 %v1379, %v1803
        %v1868 = vadd.f32 %v1381, %v1804
        %v1869 = vadd.f32 %v1270, %v1805
        %v1870 = vadd.f32 %v1272, %v1806
        %v1871 = vadd.f32 %v1383, %v1807
        %v1872 = vadd.f32 %v1385, %v1808
        %v1873 = vadd.f32 %v1276, %v1809
        %v1874 = vadd.f32 %v1278, %v1810
        %v1875 = vadd.f32 %v1389, %v1811
        %v1876 = vadd.f32 %v1391, %v1812
        %v1877 = vadd.f32 %v1280, %v1813
        %v1878 = vadd.f32 %v1282, %v1814
        %v1879 = vadd.f32 %v1393, %v1815
        %v1880 = vadd.f32 %v1395, %v1816
        %v1881 = vadd.f32 %v1286, %v1817
        %v1882 = vadd.f32 %v1288, %v1818
        %v1883 = vadd.f32 %v1399, %v1819
        %v1884 = vadd.f32 %v1401, %v1820
        %v1885 = vadd.f32 %v1290, %v1821
        %v1886 = vadd.f32 %v1292, %v1822
        %v1887 = vadd.f32 %v1403, %v1823
        %v1888 = vadd.f32 %v1405, %v1824
        %v1889 = vmul.f32 %v1825, 0.7978846
        %v1890 = vmul.f32 %v1826, 0.7978846
        %v1891 = vmul.f32 %v1827, 0.7978846
        %v1892 = vmul.f32 %v1828, 0.7978846
        %v1893 = vmul.f32 %v1829, 0.7978846
        %v1894 = vmul.f32 %v1830, 0.7978846
        %v1895 = vmul.f32 %v1831, 0.7978846
        %v1896 = vmul.f32 %v1832, 0.7978846
        %v1897 = vmul.f32 %v1833, 0.7978846
        %v1898 = vmul.f32 %v1834, 0.7978846
        %v1899 = vmul.f32 %v1835, 0.7978846
        %v1900 = vmul.f32 %v1836, 0.7978846
        %v1901 = vmul.f32 %v1837, 0.7978846
        %v1902 = vmul.f32 %v1838, 0.7978846
        %v1903 = vmul.f32 %v1839, 0.7978846
        %v1904 = vmul.f32 %v1840, 0.7978846
        %v1905 = vmul.f32 %v1841, 0.7978846
        %v1906 = vmul.f32 %v1842, 0.7978846
        %v1907 = vmul.f32 %v1843, 0.7978846
        %v1908 = vmul.f32 %v1844, 0.7978846
        %v1909 = vmul.f32 %v1845, 0.7978846
        %v1910 = vmul.f32 %v1846, 0.7978846
        %v1911 = vmul.f32 %v1847, 0.7978846
        %v1912 = vmul.f32 %v1848, 0.7978846
        %v1913 = vmul.f32 %v1849, 0.7978846
        %v1914 = vmul.f32 %v1850, 0.7978846
        %v1915 = vmul.f32 %v1851, 0.7978846
        %v1916 = vmul.f32 %v1852, 0.7978846
        %v1917 = vmul.f32 %v1853, 0.7978846
        %v1918 = vmul.f32 %v1854, 0.7978846
        %v1919 = vmul.f32 %v1855, 0.7978846
        %v1920 = vmul.f32 %v1856, 0.7978846
        %v1921 = vmul.f32 %v1857, 0.7978846
        %v1922 = vmul.f32 %v1858, 0.7978846
        %v1923 = vmul.f32 %v1859, 0.7978846
        %v1924 = vmul.f32 %v1860, 0.7978846
        %v1925 = vmul.f32 %v1861, 0.7978846
        %v1926 = vmul.f32 %v1862, 0.7978846
        %v1927 = vmul.f32 %v1863, 0.7978846
        %v1928 = vmul.f32 %v1864, 0.7978846
        %v1929 = vmul.f32 %v1865, 0.7978846
        %v1930 = vmul.f32 %v1866, 0.7978846
        %v1931 = vmul.f32 %v1867, 0.7978846
        %v1932 = vmul.f32 %v1868, 0.7978846
        %v1933 = vmul.f32 %v1869, 0.7978846
        %v1934 = vmul.f32 %v1870, 0.7978846
        %v1935 = vmul.f32 %v1871, 0.7978846
        %v1936 = vmul.f32 %v1872, 0.7978846
        %v1937 = vmul.f32 %v1873, 0.7978846
        %v1938 = vmul.f32 %v1874, 0.7978846
        %v1939 = vmul.f32 %v1875, 0.7978846
        %v1940 = vmul.f32 %v1876, 0.7978846
        %v1941 = vmul.f32 %v1877, 0.7978846
        %v1942 = vmul.f32 %v1878, 0.7978846
        %v1943 = vmul.f32 %v1879, 0.7978846
        %v1944 = vmul.f32 %v1880, 0.7978846
        %v1945 = vmul.f32 %v1881, 0.7978846
        %v1946 = vmul.f32 %v1882, 0.7978846
        %v1947 = vmul.f32 %v1883, 0.7978846
        %v1948 = vmul.f32 %v1884, 0.7978846
        %v1949 = vmul.f32 %v1885, 0.7978846
        %v1950 = vmul.f32 %v1886, 0.7978846
        %v1951 = vmul.f32 %v1887, 0.7978846
        %v1952 = vmul.f32 %v1888, 0.7978846
        %v1953 = vmul.f32 %v1216, 0.5
        %v1954 = vmul.f32 %v1218, 0.5
        %v1955 = vmul.f32 %v1329, 0.5
        %v1956 = vmul.f32 %v1331, 0.5
        %v1957 = vmul.f32 %v1220, 0.5
        %v1958 = vmul.f32 %v1222, 0.5
        %v1959 = vmul.f32 %v1333, 0.5
        %v1960 = vmul.f32 %v1335, 0.5
        %v1961 = vmul.f32 %v1226, 0.5
        %v1962 = vmul.f32 %v1228, 0.5
        %v1963 = vmul.f32 %v1339, 0.5
        %v1964 = vmul.f32 %v1341, 0.5
        %v1965 = vmul.f32 %v1230, 0.5
        %v1966 = vmul.f32 %v1232, 0.5
        %v1967 = vmul.f32 %v1343, 0.5
        %v1968 = vmul.f32 %v1345, 0.5
        %v1969 = vmul.f32 %v1236, 0.5
        %v1970 = vmul.f32 %v1238, 0.5
        %v1971 = vmul.f32 %v1349, 0.5
        %v1972 = vmul.f32 %v1351, 0.5
        %v1973 = vmul.f32 %v1240, 0.5
        %v1974 = vmul.f32 %v1242, 0.5
        %v1975 = vmul.f32 %v1353, 0.5
        %v1976 = vmul.f32 %v1355, 0.5
        %v1977 = vmul.f32 %v1246, 0.5
        %v1978 = vmul.f32 %v1248, 0.5
        %v1979 = vmul.f32 %v1359, 0.5
        %v1980 = vmul.f32 %v1361, 0.5
        %v1981 = vmul.f32 %v1250, 0.5
        %v1982 = vmul.f32 %v1252, 0.5
        %v1983 = vmul.f32 %v1363, 0.5
        %v1984 = vmul.f32 %v1365, 0.5
        %v1985 = vmul.f32 %v1256, 0.5
        %v1986 = vmul.f32 %v1258, 0.5
        %v1987 = vmul.f32 %v1369, 0.5
        %v1988 = vmul.f32 %v1371, 0.5
        %v1989 = vmul.f32 %v1260, 0.5
        %v1990 = vmul.f32 %v1262, 0.5
        %v1991 = vmul.f32 %v1373, 0.5
        %v1992 = vmul.f32 %v1375, 0.5
        %v1993 = vmul.f32 %v1266, 0.5
        %v1994 = vmul.f32 %v1268, 0.5
        %v1995 = vmul.f32 %v1379, 0.5
        %v1996 = vmul.f32 %v1381, 0.5
        %v1997 = vmul.f32 %v1270, 0.5
        %v1998 = vmul.f32 %v1272, 0.5
        %v1999 = vmul.f32 %v1383, 0.5
        %v2000 = vmul.f32 %v1385, 0.5
        %v2001 = vmul.f32 %v1276, 0.5
        %v2002 = vmul.f32 %v1278, 0.5
        %v2003 = vmul.f32 %v1389, 0.5
        %v2004 = vmul.f32 %v1391, 0.5
        %v2005 = vmul.f32 %v1280, 0.5
        %v2006 = vmul.f32 %v1282, 0.5
        %v2007 = vmul.f32 %v1393, 0.5
        %v2008 = vmul.f32 %v1395, 0.5
        %v2009 = vmul.f32 %v1286, 0.5
        %v2010 = vmul.f32 %v1288, 0.5
        %v2011 = vmul.f32 %v1399, 0.5
        %v2012 = vmul.f32 %v1401, 0.5
        %v2013 = vmul.f32 %v1290, 0.5
        %v2014 = vmul.f32 %v1292, 0.5
        %v2015 = vmul.f32 %v1403, 0.5
        %v2016 = vmul.f32 %v1405, 0.5
        %v2017 = vtanh.pop %v1889
        %v2018 = vtanh.pop %v1890
        %v2019 = vtanh.pop %v1891
        %v2020 = vtanh.pop %v1892
        %v2021 = vtanh.pop %v1893
        %v2022 = vtanh.pop %v1894
        %v2023 = vtanh.pop %v1895
        %v2024 = vtanh.pop %v1896
        %v2025 = vtanh.pop %v1897
        %v2026 = vtanh.pop %v1898
        %v2027 = vtanh.pop %v1899
        %v2028 = vtanh.pop %v1900
        %v2029 = vtanh.pop %v1901
        %v2030 = vtanh.pop %v1902
        %v2031 = vtanh.pop %v1903
        %v2032 = vtanh.pop %v1904
        %v2033 = vtanh.pop %v1905
        %v2034 = vtanh.pop %v1906
        %v2035 = vtanh.pop %v1907
        %v2036 = vtanh.pop %v1908
        %v2037 = vtanh.pop %v1909
        %v2038 = vtanh.pop %v1910
        %v2039 = vtanh.pop %v1911
        %v2040 = vtanh.pop %v1912
        %v2041 = vtanh.pop %v1913
        %v2042 = vtanh.pop %v1914
        %v2043 = vtanh.pop %v1915
        %v2044 = vtanh.pop %v1916
        %v2045 = vtanh.pop %v1917
        %v2046 = vtanh.pop %v1918
        %v2047 = vtanh.pop %v1919
        %v2048 = vtanh.pop %v1920
        %v2049 = vtanh.pop %v1921
        %v2050 = vtanh.pop %v1922
        %v2051 = vtanh.pop %v1923
        %v2052 = vtanh.pop %v1924
        %v2053 = vtanh.pop %v1925
        %v2054 = vtanh.pop %v1926
        %v2055 = vtanh.pop %v1927
        %v2056 = vtanh.pop %v1928
        %v2057 = vtanh.pop %v1929
        %v2058 = vtanh.pop %v1930
        %v2059 = vtanh.pop %v1931
        %v2060 = vtanh.pop %v1932
        %v2061 = vtanh.pop %v1933
        %v2062 = vtanh.pop %v1934
        %v2063 = vtanh.pop %v1935
        %v2064 = vtanh.pop %v1936
        %v2065 = vtanh.pop %v1937
        %v2066 = vtanh.pop %v1938
        %v2067 = vtanh.pop %v1939
        %v2068 = vtanh.pop %v1940
        %v2069 = vtanh.pop %v1941
        %v2070 = vtanh.pop %v1942
        %v2071 = vtanh.pop %v1943
        %v2072 = vtanh.pop %v1944
        %v2073 = vtanh.pop %v1945
        %v2074 = vtanh.pop %v1946
        %v2075 = vtanh.pop %v1947
        %v2076 = vtanh.pop %v1948
        %v2077 = vtanh.pop %v1949
        %v2078 = vtanh.pop %v1950
        %v2079 = vtanh.pop %v1951
        %v2080 = vtanh.pop %v1952
        %v2081 = vadd.f32 %v2017, 1.0
        %v2082 = vadd.f32 %v2018, 1.0
        %v2083 = vadd.f32 %v2019, 1.0
        %v2084 = vadd.f32 %v2020, 1.0
        %v2085 = vadd.f32 %v2021, 1.0
        %v2086 = vadd.f32 %v2022, 1.0
        %v2087 = vadd.f32 %v2023, 1.0
        %v2088 = vadd.f32 %v2024, 1.0
        %v2089 = vadd.f32 %v2025, 1.0
        %v2090 = vadd.f32 %v2026, 1.0
        %v2091 = vadd.f32 %v2027, 1.0
        %v2092 = vadd.f32 %v2028, 1.0
        %v2093 = vadd.f32 %v2029, 1.0
        %v2094 = vadd.f32 %v2030, 1.0
        %v2095 = vadd.f32 %v2031, 1.0
        %v2096 = vadd.f32 %v2032, 1.0
        %v2097 = vadd.f32 %v2033, 1.0
        %v2098 = vadd.f32 %v2034, 1.0
        %v2099 = vadd.f32 %v2035, 1.0
        %v2100 = vadd.f32 %v2036, 1.0
        %v2101 = vadd.f32 %v2037, 1.0
        %v2102 = vadd.f32 %v2038, 1.0
        %v2103 = vadd.f32 %v2039, 1.0
        %v2104 = vadd.f32 %v2040, 1.0
        %v2105 = vadd.f32 %v2041, 1.0
        %v2106 = vadd.f32 %v2042, 1.0
        %v2107 = vadd.f32 %v2043, 1.0
        %v2108 = vadd.f32 %v2044, 1.0
        %v2109 = vadd.f32 %v2045, 1.0
        %v2110 = vadd.f32 %v2046, 1.0
        %v2111 = vadd.f32 %v2047, 1.0
        %v2112 = vadd.f32 %v2048, 1.0
        %v2113 = vadd.f32 %v2049, 1.0
        %v2114 = vadd.f32 %v2050, 1.0
        %v2115 = vadd.f32 %v2051, 1.0
        %v2116 = vadd.f32 %v2052, 1.0
        %v2117 = vadd.f32 %v2053, 1.0
        %v2118 = vadd.f32 %v2054, 1.0
        %v2119 = vadd.f32 %v2055, 1.0
        %v2120 = vadd.f32 %v2056, 1.0
        %v2121 = vadd.f32 %v2057, 1.0
        %v2122 = vadd.f32 %v2058, 1.0
        %v2123 = vadd.f32 %v2059, 1.0
        %v2124 = vadd.f32 %v2060, 1.0
        %v2125 = vadd.f32 %v2061, 1.0
        %v2126 = vadd.f32 %v2062, 1.0
        %v2127 = vadd.f32 %v2063, 1.0
        %v2128 = vadd.f32 %v2064, 1.0
        %v2129 = vadd.f32 %v2065, 1.0
        %v2130 = vadd.f32 %v2066, 1.0
        %v2131 = vadd.f32 %v2067, 1.0
        %v2132 = vadd.f32 %v2068, 1.0
        %v2133 = vadd.f32 %v2069, 1.0
        %v2134 = vadd.f32 %v2070, 1.0
        %v2135 = vadd.f32 %v2071, 1.0
        %v2136 = vadd.f32 %v2072, 1.0
        %v2137 = vadd.f32 %v2073, 1.0
        %v2138 = vadd.f32 %v2074, 1.0
        %v2139 = vadd.f32 %v2075, 1.0
        %v2140 = vadd.f32 %v2076, 1.0
        %v2141 = vadd.f32 %v2077, 1.0
        %v2142 = vadd.f32 %v2078, 1.0
        %v2143 = vadd.f32 %v2079, 1.0
        %v2144 = vadd.f32 %v2080, 1.0
        %v2145 = vmul.f32 %v1953, %v2081
        %v2146 = vmul.f32 %v1954, %v2082
        %v2147 = vmul.f32 %v1955, %v2083
        %v2148 = vmul.f32 %v1956, %v2084
        %v2149 = vmul.f32 %v1957, %v2085
        %v2150 = vmul.f32 %v1958, %v2086
        %v2151 = vmul.f32 %v1959, %v2087
        %v2152 = vmul.f32 %v1960, %v2088
        %v2153 = vmul.f32 %v1961, %v2089
        %v2154 = vmul.f32 %v1962, %v2090
        %v2155 = vmul.f32 %v1963, %v2091
        %v2156 = vmul.f32 %v1964, %v2092
        %v2157 = vmul.f32 %v1965, %v2093
        %v2158 = vmul.f32 %v1966, %v2094
        %v2159 = vmul.f32 %v1967, %v2095
        %v2160 = vmul.f32 %v1968, %v2096
        %v2161 = vmul.f32 %v1969, %v2097
        %v2162 = vmul.f32 %v1970, %v2098
        %v2163 = vmul.f32 %v1971, %v2099
        %v2164 = vmul.f32 %v1972, %v2100
        %v2165 = vmul.f32 %v1973, %v2101
        %v2166 = vmul.f32 %v1974, %v2102
        %v2167 = vmul.f32 %v1975, %v2103
        %v2168 = vmul.f32 %v1976, %v2104
        %v2169 = vmul.f32 %v1977, %v2105
        %v2170 = vmul.f32 %v1978, %v2106
        %v2171 = vmul.f32 %v1979, %v2107
        %v2172 = vmul.f32 %v1980, %v2108
        %v2173 = vmul.f32 %v1981, %v2109
        %v2174 = vmul.f32 %v1982, %v2110
        %v2175 = vmul.f32 %v1983, %v2111
        %v2176 = vmul.f32 %v1984, %v2112
        %v2177 = vmul.f32 %v1985, %v2113
        %v2178 = vmul.f32 %v1986, %v2114
        %v2179 = vmul.f32 %v1987, %v2115
        %v2180 = vmul.f32 %v1988, %v2116
        %v2181 = vmul.f32 %v1989, %v2117
        %v2182 = vmul.f32 %v1990, %v2118
        %v2183 = vmul.f32 %v1991, %v2119
        %v2184 = vmul.f32 %v1992, %v2120
        %v2185 = vmul.f32 %v1993, %v2121
        %v2186 = vmul.f32 %v1994, %v2122
        %v2187 = vmul.f32 %v1995, %v2123
        %v2188 = vmul.f32 %v1996, %v2124
        %v2189 = vmul.f32 %v1997, %v2125
        %v2190 = vmul.f32 %v1998, %v2126
        %v2191 = vmul.f32 %v1999, %v2127
        %v2192 = vmul.f32 %v2000, %v2128
        %v2193 = vmul.f32 %v2001, %v2129
        %v2194 = vmul.f32 %v2002, %v2130
        %v2195 = vmul.f32 %v2003, %v2131
        %v2196 = vmul.f32 %v2004, %v2132
        %v2197 = vmul.f32 %v2005, %v2133
        %v2198 = vmul.f32 %v2006, %v2134
        %v2199 = vmul.f32 %v2007, %v2135
        %v2200 = vmul.f32 %v2008, %v2136
        %v2201 = vmul.f32 %v2009, %v2137
        %v2202 = vmul.f32 %v2010, %v2138
        %v2203 = vmul.f32 %v2011, %v2139
        %v2204 = vmul.f32 %v2012, %v2140
        %v2205 = vmul.f32 %v2013, %v2141
        %v2206 = vmul.f32 %v2014, %v2142
        %v2207 = vmul.f32 %v2015, %v2143
        %v2208 = vmul.f32 %v2016, %v2144
        %v2209 = vmul.f32 %v2145, %v1442
        %v2210 = vmul.f32 %v2146, %v1444
        %v2211 = vmul.f32 %v2147, %v1555
        %v2212 = vmul.f32 %v2148, %v1557
        %v2213 = vmul.f32 %v2149, %v1446
        %v2214 = vmul.f32 %v2150, %v1448
        %v2215 = vmul.f32 %v2151, %v1559
        %v2216 = vmul.f32 %v2152, %v1561
        %v2217 = vmul.f32 %v2153, %v1452
        %v2218 = vmul.f32 %v2154, %v1454
        %v2219 = vmul.f32 %v2155, %v1565
        %v2220 = vmul.f32 %v2156, %v1567
        %v2221 = vmul.f32 %v2157, %v1456
        %v2222 = vmul.f32 %v2158, %v1458
        %v2223 = vmul.f32 %v2159, %v1569
        %v2224 = vmul.f32 %v2160, %v1571
        %v2225 = vmul.f32 %v2161, %v1462
        %v2226 = vmul.f32 %v2162, %v1464
        %v2227 = vmul.f32 %v2163, %v1575
        %v2228 = vmul.f32 %v2164, %v1577
        %v2229 = vmul.f32 %v2165, %v1466
        %v2230 = vmul.f32 %v2166, %v1468
        %v2231 = vmul.f32 %v2167, %v1579
        %v2232 = vmul.f32 %v2168, %v1581
        %v2233 = vmul.f32 %v2169, %v1472
        %v2234 = vmul.f32 %v2170, %v1474
        %v2235 = vmul.f32 %v2171, %v1585
        %v2236 = vmul.f32 %v2172, %v1587
        %v2237 = vmul.f32 %v2173, %v1476
        %v2238 = vmul.f32 %v2174, %v1478
        %v2239 = vmul.f32 %v2175, %v1589
        %v2240 = vmul.f32 %v2176, %v1591
        %v2241 = vmul.f32 %v2177, %v1482
        %v2242 = vmul.f32 %v2178, %v1484
        %v2243 = vmul.f32 %v2179, %v1595
        %v2244 = vmul.f32 %v2180, %v1597
        %v2245 = vmul.f32 %v2181, %v1486
        %v2246 = vmul.f32 %v2182, %v1488
        %v2247 = vmul.f32 %v2183, %v1599
        %v2248 = vmul.f32 %v2184, %v1601
        %v2249 = vmul.f32 %v2185, %v1492
        %v2250 = vmul.f32 %v2186, %v1494
        %v2251 = vmul.f32 %v2187, %v1605
        %v2252 = vmul.f32 %v2188, %v1607
        %v2253 = vmul.f32 %v2189, %v1496
        %v2254 = vmul.f32 %v2190, %v1498
        %v2255 = vmul.f32 %v2191, %v1609
        %v2256 = vmul.f32 %v2192, %v1611
        %v2257 = vmul.f32 %v2193, %v1502
        %v2258 = vmul.f32 %v2194, %v1504
        %v2259 = vmul.f32 %v2195, %v1615
        %v2260 = vmul.f32 %v2196, %v1617
        %v2261 = vmul.f32 %v2197, %v1506
        %v2262 = vmul.f32 %v2198, %v1508
        %v2263 = vmul.f32 %v2199, %v1619
        %v2264 = vmul.f32 %v2200, %v1621
        %v2265 = vmul.f32 %v2201, %v1512
        %v2266 = vmul.f32 %v2202, %v1514
        %v2267 = vmul.f32 %v2203, %v1625
        %v2268 = vmul.f32 %v2204, %v1627
        %v2269 = vmul.f32 %v2205, %v1516
        %v2270 = vmul.f32 %v2206, %v1518
        %v2271 = vmul.f32 %v2207, %v1629
        %v2272 = vmul.f32 %v2208, %v1631
        %v2273 = vpack.c.bf16 %v2213, %v2209
        %v2274 = vpack.c.bf16 %v2214, %v2210
        %v2275 = vpack.c.bf16 %v2215, %v2211
        %v2276 = vpack.c.bf16 %v2216, %v2212
        %v2277 = vpack.c.bf16 %v2221, %v2217
        %v2278 = vpack.c.bf16 %v2222, %v2218
        %v2279 = vpack.c.bf16 %v2223, %v2219
        %v2280 = vpack.c.bf16 %v2224, %v2220
        %v2281 = vpack.c.bf16 %v2229, %v2225
        %v2282 = vpack.c.bf16 %v2230, %v2226
        %v2283 = vpack.c.bf16 %v2231, %v2227
        %v2284 = vpack.c.bf16 %v2232, %v2228
        %v2285 = vpack.c.bf16 %v2237, %v2233
        %v2286 = vpack.c.bf16 %v2238, %v2234
        %v2287 = vpack.c.bf16 %v2239, %v2235
        %v2288 = vpack.c.bf16 %v2240, %v2236
        %v2289 = vpack.c.bf16 %v2245, %v2241
        %v2290 = vpack.c.bf16 %v2246, %v2242
        %v2291 = vpack.c.bf16 %v2247, %v2243
        %v2292 = vpack.c.bf16 %v2248, %v2244
        %v2293 = vpack.c.bf16 %v2253, %v2249
        %v2294 = vpack.c.bf16 %v2254, %v2250
        %v2295 = vpack.c.bf16 %v2255, %v2251
        %v2296 = vpack.c.bf16 %v2256, %v2252
        %v2297 = vpack.c.bf16 %v2261, %v2257
        %v2298 = vpack.c.bf16 %v2262, %v2258
        %v2299 = vpack.c.bf16 %v2263, %v2259
        %v2300 = vpack.c.bf16 %v2264, %v2260
        %v2301 = vpack.c.bf16 %v2269, %v2265
        %v2302 = vpack.c.bf16 %v2270, %v2266
        %v2303 = vpack.c.bf16 %v2271, %v2267
        %v2304 = vpack.c.bf16 %v2272, %v2268
        %v2305 = vld [vmem:[#allocation7] sm:$0xff]
        %v2306 = vld [vmem:[#allocation7 + $0x8] sm:$0xff]
        %v2307 = vld [vmem:[#allocation7 + $0x10] sm:$0xff]
        %v2308 = vld [vmem:[#allocation7 + $0x18] sm:$0xff]
        %v2309 = vld [vmem:[#allocation7 + $0x20] sm:$0xff]
        %v2310 = vld [vmem:[#allocation7 + $0x28] sm:$0xff]
        %v2311 = vld [vmem:[#allocation7 + $0x30] sm:$0xff]
        %v2312 = vld [vmem:[#allocation7 + $0x38] sm:$0xff]
        %v2313 = vld [vmem:[#allocation7 + $0x40] sm:$0xff]
        %v2314 = vld [vmem:[#allocation7 + $0x48] sm:$0xff]
        %v2315 = vld [vmem:[#allocation7 + $0x50] sm:$0xff]
        %v2316 = vld [vmem:[#allocation7 + $0x58] sm:$0xff]
        %v2317 = vld [vmem:[#allocation7 + $0x60] sm:$0xff]
        %v2318 = vld [vmem:[#allocation7 + $0x68] sm:$0xff]
        %v2319 = vld [vmem:[#allocation7 + $0x70] sm:$0xff]
        %v2320 = vld [vmem:[#allocation7 + $0x78] sm:$0xff]
        %v2321 = vld [vmem:[#allocation7 + $0x80] sm:$0xff]
        %v2322 = vld [vmem:[#allocation7 + $0x88] sm:$0xff]
        %v2323 = vld [vmem:[#allocation7 + $0x90] sm:$0xff]
        %v2324 = vld [vmem:[#allocation7 + $0x98] sm:$0xff]
        %v2325 = vld [vmem:[#allocation7 + $0xa0] sm:$0xff]
        %v2326 = vld [vmem:[#allocation7 + $0xa8] sm:$0xff]
        %v2327 = vld [vmem:[#allocation7 + $0xb0] sm:$0xff]
        %v2328 = vld [vmem:[#allocation7 + $0xb8] sm:$0xff]
        %v2329 = vld [vmem:[#allocation7 + $0xc0] sm:$0xff]
        %v2330 = vld [vmem:[#allocation7 + $0xc8] sm:$0xff]
        %v2331 = vld [vmem:[#allocation7 + $0xd0] sm:$0xff]
        %v2332 = vld [vmem:[#allocation7 + $0xd8] sm:$0xff]
        %v2333 = vld [vmem:[#allocation7 + $0xe0] sm:$0xff]
        %v2334 = vld [vmem:[#allocation7 + $0xe8] sm:$0xff]
        %v2335 = vld [vmem:[#allocation7 + $0xf0] sm:$0xff]
        %v2336 = vld [vmem:[#allocation7 + $0xf8] sm:$0xff]
        %v2337 = vld [vmem:[#allocation7 + $0x100] sm:$0xff]
        %v2338 = vld [vmem:[#allocation7 + $0x108] sm:$0xff]
        %v2339 = vld [vmem:[#allocation7 + $0x110] sm:$0xff]
        %v2340 = vld [vmem:[#allocation7 + $0x118] sm:$0xff]
        %v2341 = vld [vmem:[#allocation7 + $0x120] sm:$0xff]
        %v2342 = vld [vmem:[#allocation7 + $0x128] sm:$0xff]
        %v2343 = vld [vmem:[#allocation7 + $0x130] sm:$0xff]
        %v2344 = vld [vmem:[#allocation7 + $0x138] sm:$0xff]
        %v2345 = vld [vmem:[#allocation7 + $0x140] sm:$0xff]
        %v2346 = vld [vmem:[#allocation7 + $0x148] sm:$0xff]
        %v2347 = vld [vmem:[#allocation7 + $0x150] sm:$0xff]
        %v2348 = vld [vmem:[#allocation7 + $0x158] sm:$0xff]
        %v2349 = vld [vmem:[#allocation7 + $0x160] sm:$0xff]
        %v2350 = vld [vmem:[#allocation7 + $0x168] sm:$0xff]
        %v2351 = vld [vmem:[#allocation7 + $0x170] sm:$0xff]
        %v2352 = vld [vmem:[#allocation7 + $0x178] sm:$0xff]
        %v2353 = vld [vmem:[#allocation7 + $0x180] sm:$0xff]
        %v2354 = vld [vmem:[#allocation7 + $0x188] sm:$0xff]
        %v2355 = vld [vmem:[#allocation7 + $0x190] sm:$0xff]
        %v2356 = vld [vmem:[#allocation7 + $0x198] sm:$0xff]
        %v2357 = vld [vmem:[#allocation7 + $0x1a0] sm:$0xff]
        %v2358 = vld [vmem:[#allocation7 + $0x1a8] sm:$0xff]
        %v2359 = vld [vmem:[#allocation7 + $0x1b0] sm:$0xff]
        %v2360 = vld [vmem:[#allocation7 + $0x1b8] sm:$0xff]
        %v2361 = vld [vmem:[#allocation7 + $0x1c0] sm:$0xff]
        %v2362 = vld [vmem:[#allocation7 + $0x1c8] sm:$0xff]
        %v2363 = vld [vmem:[#allocation7 + $0x1d0] sm:$0xff]
        %v2364 = vld [vmem:[#allocation7 + $0x1d8] sm:$0xff]
        %v2365 = vld [vmem:[#allocation7 + $0x1e0] sm:$0xff]
        %v2366 = vld [vmem:[#allocation7 + $0x1e8] sm:$0xff]
        %v2367 = vld [vmem:[#allocation7 + $0x1f0] sm:$0xff]
        %v2368 = vld [vmem:[#allocation7 + $0x1f8] sm:$0xff]
        %v2433 = vunpack.c.l.b16 %v2305
        %v2434 = vunpack.c.h.b16 %v2305
        %v2435 = vunpack.c.l.b16 %v2306
        %v2436 = vunpack.c.h.b16 %v2306
        %v2437 = vunpack.c.l.b16 %v2307
        %v2438 = vunpack.c.h.b16 %v2307
        %v2439 = vunpack.c.l.b16 %v2308
        %v2440 = vunpack.c.h.b16 %v2308
        %v2441 = vunpack.c.l.b16 %v2309
        %v2442 = vunpack.c.h.b16 %v2309
        %v2443 = vunpack.c.l.b16 %v2310
        %v2444 = vunpack.c.h.b16 %v2310
        %v2445 = vunpack.c.l.b16 %v2311
        %v2446 = vunpack.c.h.b16 %v2311
        %v2447 = vunpack.c.l.b16 %v2312
        %v2448 = vunpack.c.h.b16 %v2312
        %v2449 = vunpack.c.l.b16 %v2313
        %v2450 = vunpack.c.h.b16 %v2313
        %v2451 = vunpack.c.l.b16 %v2314
        %v2452 = vunpack.c.h.b16 %v2314
        %v2453 = vunpack.c.l.b16 %v2315
        %v2454 = vunpack.c.h.b16 %v2315
        %v2455 = vunpack.c.l.b16 %v2316
        %v2456 = vunpack.c.h.b16 %v2316
        %v2457 = vunpack.c.l.b16 %v2317
        %v2458 = vunpack.c.h.b16 %v2317
        %v2459 = vunpack.c.l.b16 %v2318
        %v2460 = vunpack.c.h.b16 %v2318
        %v2461 = vunpack.c.l.b16 %v2319
        %v2462 = vunpack.c.h.b16 %v2319
        %v2463 = vunpack.c.l.b16 %v2320
        %v2464 = vunpack.c.h.b16 %v2320
        %v2465 = vunpack.c.l.b16 %v2321
        %v2466 = vunpack.c.h.b16 %v2321
        %v2467 = vunpack.c.l.b16 %v2322
        %v2468 = vunpack.c.h.b16 %v2322
        %v2469 = vunpack.c.l.b16 %v2323
        %v2470 = vunpack.c.h.b16 %v2323
        %v2471 = vunpack.c.l.b16 %v2324
        %v2472 = vunpack.c.h.b16 %v2324
        %v2473 = vunpack.c.l.b16 %v2325
        %v2474 = vunpack.c.h.b16 %v2325
        %v2475 = vunpack.c.l.b16 %v2326
        %v2476 = vunpack.c.h.b16 %v2326
        %v2477 = vunpack.c.l.b16 %v2327
        %v2478 = vunpack.c.h.b16 %v2327
        %v2479 = vunpack.c.l.b16 %v2328
        %v2480 = vunpack.c.h.b16 %v2328
        %v2481 = vunpack.c.l.b16 %v2329
        %v2482 = vunpack.c.h.b16 %v2329
        %v2483 = vunpack.c.l.b16 %v2330
        %v2484 = vunpack.c.h.b16 %v2330
        %v2485 = vunpack.c.l.b16 %v2331
        %v2486 = vunpack.c.h.b16 %v2331
        %v2487 = vunpack.c.l.b16 %v2332
        %v2488 = vunpack.c.h.b16 %v2332
        %v2489 = vunpack.c.l.b16 %v2333
        %v2490 = vunpack.c.h.b16 %v2333
        %v2491 = vunpack.c.l.b16 %v2334
        %v2492 = vunpack.c.h.b16 %v2334
        %v2493 = vunpack.c.l.b16 %v2335
        %v2494 = vunpack.c.h.b16 %v2335
        %v2495 = vunpack.c.l.b16 %v2336
        %v2496 = vunpack.c.h.b16 %v2336
        %v2497 = vunpack.c.l.b16 %v2337
        %v2498 = vunpack.c.h.b16 %v2337
        %v2499 = vunpack.c.l.b16 %v2338
        %v2500 = vunpack.c.h.b16 %v2338
        %v2501 = vunpack.c.l.b16 %v2339
        %v2502 = vunpack.c.h.b16 %v2339
        %v2503 = vunpack.c.l.b16 %v2340
        %v2504 = vunpack.c.h.b16 %v2340
        %v2505 = vunpack.c.l.b16 %v2341
        %v2506 = vunpack.c.h.b16 %v2341
        %v2507 = vunpack.c.l.b16 %v2342
        %v2508 = vunpack.c.h.b16 %v2342
        %v2509 = vunpack.c.l.b16 %v2343
        %v2510 = vunpack.c.h.b16 %v2343
        %v2511 = vunpack.c.l.b16 %v2344
        %v2512 = vunpack.c.h.b16 %v2344
        %v2513 = vunpack.c.l.b16 %v2345
        %v2514 = vunpack.c.h.b16 %v2345
        %v2515 = vunpack.c.l.b16 %v2346
        %v2516 = vunpack.c.h.b16 %v2346
        %v2517 = vunpack.c.l.b16 %v2347
        %v2518 = vunpack.c.h.b16 %v2347
        %v2519 = vunpack.c.l.b16 %v2348
        %v2520 = vunpack.c.h.b16 %v2348
        %v2521 = vunpack.c.l.b16 %v2349
        %v2522 = vunpack.c.h.b16 %v2349
        %v2523 = vunpack.c.l.b16 %v2350
        %v2524 = vunpack.c.h.b16 %v2350
        %v2525 = vunpack.c.l.b16 %v2351
        %v2526 = vunpack.c.h.b16 %v2351
        %v2527 = vunpack.c.l.b16 %v2352
        %v2528 = vunpack.c.h.b16 %v2352
        %v2529 = vunpack.c.l.b16 %v2353
        %v2530 = vunpack.c.h.b16 %v2353
        %v2531 = vunpack.c.l.b16 %v2354
        %v2532 = vunpack.c.h.b16 %v2354
        %v2533 = vunpack.c.l.b16 %v2355
        %v2534 = vunpack.c.h.b16 %v2355
        %v2535 = vunpack.c.l.b16 %v2356
        %v2536 = vunpack.c.h.b16 %v2356
        %v2537 = vunpack.c.l.b16 %v2357
        %v2538 = vunpack.c.h.b16 %v2357
        %v2539 = vunpack.c.l.b16 %v2358
        %v2540 = vunpack.c.h.b16 %v2358
        %v2541 = vunpack.c.l.b16 %v2359
        %v2542 = vunpack.c.h.b16 %v2359
        %v2543 = vunpack.c.l.b16 %v2360
        %v2544 = vunpack.c.h.b16 %v2360
        %v2545 = vunpack.c.l.b16 %v2361
        %v2546 = vunpack.c.h.b16 %v2361
        %v2547 = vunpack.c.l.b16 %v2362
        %v2548 = vunpack.c.h.b16 %v2362
        %v2549 = vunpack.c.l.b16 %v2363
        %v2550 = vunpack.c.h.b16 %v2363
        %v2551 = vunpack.c.l.b16 %v2364
        %v2552 = vunpack.c.h.b16 %v2364
        %v2553 = vunpack.c.l.b16 %v2365
        %v2554 = vunpack.c.h.b16 %v2365
        %v2555 = vunpack.c.l.b16 %v2366
        %v2556 = vunpack.c.h.b16 %v2366
        %v2557 = vunpack.c.l.b16 %v2367
        %v2558 = vunpack.c.h.b16 %v2367
        %v2559 = vunpack.c.l.b16 %v2368
        %v2560 = vunpack.c.h.b16 %v2368
        %v2561 = vpack.c.b16 %v2435, %v2433
        %v2562 = vpack.c.b16 %v2436, %v2434
        %v2563 = vpack.c.b16 %v2439, %v2437
        %v2564 = vpack.c.b16 %v2440, %v2438
        %v2565 = vpack.c.b16 %v2443, %v2441
        %v2566 = vpack.c.b16 %v2444, %v2442
        %v2567 = vpack.c.b16 %v2447, %v2445
        %v2568 = vpack.c.b16 %v2448, %v2446
        %v2569 = vpack.c.b16 %v2451, %v2449
        %v2570 = vpack.c.b16 %v2452, %v2450
        %v2571 = vpack.c.b16 %v2455, %v2453
        %v2572 = vpack.c.b16 %v2456, %v2454
        %v2573 = vpack.c.b16 %v2459, %v2457
        %v2574 = vpack.c.b16 %v2460, %v2458
        %v2575 = vpack.c.b16 %v2463, %v2461
        %v2576 = vpack.c.b16 %v2464, %v2462
        %v2577 = vpack.c.b16 %v2467, %v2465
        %v2578 = vpack.c.b16 %v2468, %v2466
        %v2579 = vpack.c.b16 %v2471, %v2469
        %v2580 = vpack.c.b16 %v2472, %v2470
        %v2581 = vpack.c.b16 %v2475, %v2473
        %v2582 = vpack.c.b16 %v2476, %v2474
        %v2583 = vpack.c.b16 %v2479, %v2477
        %v2584 = vpack.c.b16 %v2480, %v2478
        %v2585 = vpack.c.b16 %v2483, %v2481
        %v2586 = vpack.c.b16 %v2484, %v2482
        %v2587 = vpack.c.b16 %v2487, %v2485
        %v2588 = vpack.c.b16 %v2488, %v2486
        %v2589 = vpack.c.b16 %v2491, %v2489
        %v2590 = vpack.c.b16 %v2492, %v2490
        %v2591 = vpack.c.b16 %v2495, %v2493
        %v2592 = vpack.c.b16 %v2496, %v2494
        %v2593 = vpack.c.b16 %v2499, %v2497
        %v2594 = vpack.c.b16 %v2500, %v2498
        %v2595 = vpack.c.b16 %v2503, %v2501
        %v2596 = vpack.c.b16 %v2504, %v2502
        %v2597 = vpack.c.b16 %v2507, %v2505
        %v2598 = vpack.c.b16 %v2508, %v2506
        %v2599 = vpack.c.b16 %v2511, %v2509
        %v2600 = vpack.c.b16 %v2512, %v2510
        %v2601 = vpack.c.b16 %v2515, %v2513
        %v2602 = vpack.c.b16 %v2516, %v2514
        %v2603 = vpack.c.b16 %v2519, %v2517
        %v2604 = vpack.c.b16 %v2520, %v2518
        %v2605 = vpack.c.b16 %v2523, %v2521
        %v2606 = vpack.c.b16 %v2524, %v2522
        %v2607 = vpack.c.b16 %v2527, %v2525
        %v2608 = vpack.c.b16 %v2528, %v2526
        %v2609 = vpack.c.b16 %v2531, %v2529
        %v2610 = vpack.c.b16 %v2532, %v2530
        %v2611 = vpack.c.b16 %v2535, %v2533
        %v2612 = vpack.c.b16 %v2536, %v2534
        %v2613 = vpack.c.b16 %v2539, %v2537
        %v2614 = vpack.c.b16 %v2540, %v2538
        %v2615 = vpack.c.b16 %v2543, %v2541
        %v2616 = vpack.c.b16 %v2544, %v2542
        %v2617 = vpack.c.b16 %v2547, %v2545
        %v2618 = vpack.c.b16 %v2548, %v2546
        %v2619 = vpack.c.b16 %v2551, %v2549
        %v2620 = vpack.c.b16 %v2552, %v2550
        %v2621 = vpack.c.b16 %v2555, %v2553
        %v2622 = vpack.c.b16 %v2556, %v2554
        %v2623 = vpack.c.b16 %v2559, %v2557
        %v2624 = vpack.c.b16 %v2560, %v2558
        %2689 = vmatprep.subr.bf16.mxu0 %v2562
        %2690 = vmatpush1.bf16.msra.mxu0 %v2561
        %2691 = vmatprep.subr.bf16.mxu0 %v2564
        %2692 = vmatpush1.bf16.msra.mxu0 %v2563
        %2693 = vmatprep.subr.bf16.mxu0 %v2566
        %2694 = vmatpush1.bf16.msra.mxu0 %v2565
        %2695 = vmatprep.subr.bf16.mxu0 %v2568
        %2696 = vmatpush1.bf16.msra.mxu0 %v2567
        %2697 = vmatprep.subr.bf16.mxu0 %v2570
        %2698 = vmatpush1.bf16.msra.mxu0 %v2569
        %2699 = vmatprep.subr.bf16.mxu0 %v2572
        %2700 = vmatpush1.bf16.msra.mxu0 %v2571
        %2701 = vmatprep.subr.bf16.mxu0 %v2574
        %2702 = vmatpush1.bf16.msra.mxu0 %v2573
        %2703 = vmatprep.subr.bf16.mxu0 %v2576
        %2704 = vmatpush1.bf16.msra.mxu0 %v2575
        %2705 = vmatprep.subr.bf16.mxu0 %v2578
        %2706 = vmatpush1.bf16.msra.mxu0 %v2577
        %2707 = vmatprep.subr.bf16.mxu0 %v2580
        %2708 = vmatpush1.bf16.msra.mxu0 %v2579
        %2709 = vmatprep.subr.bf16.mxu0 %v2582
        %2710 = vmatpush1.bf16.msra.mxu0 %v2581
        %2711 = vmatprep.subr.bf16.mxu0 %v2584
        %2712 = vmatpush1.bf16.msra.mxu0 %v2583
        %2713 = vmatprep.subr.bf16.mxu0 %v2586
        %2714 = vmatpush1.bf16.msra.mxu0 %v2585
        %2715 = vmatprep.subr.bf16.mxu0 %v2588
        %2716 = vmatpush1.bf16.msra.mxu0 %v2587
        %2717 = vmatprep.subr.bf16.mxu0 %v2590
        %2718 = vmatpush1.bf16.msra.mxu0 %v2589
        %2719 = vmatprep.subr.bf16.mxu0 %v2592
        %2720 = vmatpush1.bf16.msra.mxu0 %v2591
        %2721 = vmatprep.mubr.bf16.mxu0 %v2274
        %2722 = vmatmul.mubr.bf16.gmra.mrb[0].mxu0 %v2273
        %v2723 = vpop.f32.mrb[0].mxu0
        %v2724 = vadd.f32 0.0, %v2723
        %v2725 = vpop.f32.mrb[0].mxu0
        %v2726 = vadd.f32 0.0, %v2725
        %v2727 = vpop.f32.mrb[0].mxu0
        %v2728 = vadd.f32 0.0, %v2727
        %v2729 = vpop.f32.mrb[0].mxu0
        %v2730 = vadd.f32 0.0, %v2729
        %2731 = vmatprep.mubr.bf16.mxu0 %v2278
        %2732 = vmatmul.mubr.bf16.gmra.mrb[0].mxu0 %v2277
        %v2733 = vpop.f32.mrb[0].mxu0
        %v2734 = vadd.f32 0.0, %v2733
        %v2735 = vpop.f32.mrb[0].mxu0
        %v2736 = vadd.f32 0.0, %v2735
        %v2737 = vpop.f32.mrb[0].mxu0
        %v2738 = vadd.f32 0.0, %v2737
        %v2739 = vpop.f32.mrb[0].mxu0
        %v2740 = vadd.f32 0.0, %v2739
        %2741 = vmatprep.mubr.bf16.mxu0 %v2282
        %2742 = vmatmul.mubr.bf16.gmra.mrb[0].mxu0 %v2281
        %v2743 = vpop.f32.mrb[0].mxu0
        %v2744 = vadd.f32 0.0, %v2743
        %v2745 = vpop.f32.mrb[0].mxu0
        %v2746 = vadd.f32 0.0, %v2745
        %v2747 = vpop.f32.mrb[0].mxu0
        %v2748 = vadd.f32 0.0, %v2747
        %v2749 = vpop.f32.mrb[0].mxu0
        %v2750 = vadd.f32 0.0, %v2749
        %2751 = vmatprep.mubr.bf16.mxu0 %v2286
        %2752 = vmatmul.mubr.bf16.gmra.mrb[0].mxu0 %v2285
        %v2753 = vpop.f32.mrb[0].mxu0
        %v2754 = vadd.f32 0.0, %v2753
        %v2755 = vpop.f32.mrb[0].mxu0
        %v2756 = vadd.f32 0.0, %v2755
        %v2757 = vpop.f32.mrb[0].mxu0
        %v2758 = vadd.f32 0.0, %v2757
        %v2759 = vpop.f32.mrb[0].mxu0
        %v2760 = vadd.f32 0.0, %v2759
        %2761 = vmatprep.mubr.bf16.mxu0 %v2290
        %2762 = vmatmul.mubr.bf16.gmra.mrb[0].mxu0 %v2289
        %v2763 = vpop.f32.mrb[0].mxu0
        %v2764 = vadd.f32 0.0, %v2763
        %v2765 = vpop.f32.mrb[0].mxu0
        %v2766 = vadd.f32 0.0, %v2765
        %v2767 = vpop.f32.mrb[0].mxu0
        %v2768 = vadd.f32 0.0, %v2767
        %v2769 = vpop.f32.mrb[0].mxu0
        %v2770 = vadd.f32 0.0, %v2769
        %2771 = vmatprep.mubr.bf16.mxu0 %v2294
        %2772 = vmatmul.mubr.bf16.gmra.mrb[0].mxu0 %v2293
        %v2773 = vpop.f32.mrb[0].mxu0
        %v2774 = vadd.f32 0.0, %v2773
        %v2775 = vpop.f32.mrb[0].mxu0
        %v2776 = vadd.f32 0.0, %v2775
        %v2777 = vpop.f32.mrb[0].mxu0
        %v2778 = vadd.f32 0.0, %v2777
        %v2779 = vpop.f32.mrb[0].mxu0
        %v2780 = vadd.f32 0.0, %v2779
        %2781 = vmatprep.mubr.bf16.mxu0 %v2298
        %2782 = vmatmul.mubr.bf16.gmra.mrb[0].mxu0 %v2297
        %v2783 = vpop.f32.mrb[0].mxu0
        %v2784 = vadd.f32 0.0, %v2783
        %v2785 = vpop.f32.mrb[0].mxu0
        %v2786 = vadd.f32 0.0, %v2785
        %v2787 = vpop.f32.mrb[0].mxu0
        %v2788 = vadd.f32 0.0, %v2787
        %v2789 = vpop.f32.mrb[0].mxu0
        %v2790 = vadd.f32 0.0, %v2789
        %2791 = vmatprep.mubr.bf16.mxu0 %v2302
        %2792 = vmatmul.mubr.bf16.gmra.mrb[0].mxu0 %v2301
        %v2793 = vpop.f32.mrb[0].mxu0
        %v2794 = vadd.f32 0.0, %v2793
        %v2795 = vpop.f32.mrb[0].mxu0
        %v2796 = vadd.f32 0.0, %v2795
        %v2797 = vpop.f32.mrb[0].mxu0
        %v2798 = vadd.f32 0.0, %v2797
        %v2799 = vpop.f32.mrb[0].mxu0
        %v2800 = vadd.f32 0.0, %v2799
        %2801 = vdwg.mxu0
        %2802 = vmatprep.subr.bf16.mxu0 %v2594
        %2803 = vmatpush1.bf16.msra.mxu0 %v2593
        %2804 = vmatprep.subr.bf16.mxu0 %v2596
        %2805 = vmatpush1.bf16.msra.mxu0 %v2595
        %2806 = vmatprep.subr.bf16.mxu0 %v2598
        %2807 = vmatpush1.bf16.msra.mxu0 %v2597
        %2808 = vmatprep.subr.bf16.mxu0 %v2600
        %2809 = vmatpush1.bf16.msra.mxu0 %v2599
        %2810 = vmatprep.subr.bf16.mxu0 %v2602
        %2811 = vmatpush1.bf16.msra.mxu0 %v2601
        %2812 = vmatprep.subr.bf16.mxu0 %v2604
        %2813 = vmatpush1.bf16.msra.mxu0 %v2603
        %2814 = vmatprep.subr.bf16.mxu0 %v2606
        %2815 = vmatpush1.bf16.msra.mxu0 %v2605
        %2816 = vmatprep.subr.bf16.mxu0 %v2608
        %2817 = vmatpush1.bf16.msra.mxu0 %v2607
        %2818 = vmatprep.subr.bf16.mxu0 %v2610
        %2819 = vmatpush1.bf16.msra.mxu0 %v2609
        %2820 = vmatprep.subr.bf16.mxu0 %v2612
        %2821 = vmatpush1.bf16.msra.mxu0 %v2611
        %2822 = vmatprep.subr.bf16.mxu0 %v2614
        %2823 = vmatpush1.bf16.msra.mxu0 %v2613
        %2824 = vmatprep.subr.bf16.mxu0 %v2616
        %2825 = vmatpush1.bf16.msra.mxu0 %v2615
        %2826 = vmatprep.subr.bf16.mxu0 %v2618
        %2827 = vmatpush1.bf16.msra.mxu0 %v2617
        %2828 = vmatprep.subr.bf16.mxu0 %v2620
        %2829 = vmatpush1.bf16.msra.mxu0 %v2619
        %2830 = vmatprep.subr.bf16.mxu0 %v2622
        %2831 = vmatpush1.bf16.msra.mxu0 %v2621
        %2832 = vmatprep.subr.bf16.mxu0 %v2624
        %2833 = vmatpush1.bf16.msra.mxu0 %v2623
        %2834 = vmatprep.mubr.bf16.mxu0 %v2276
        %2835 = vmatmul.mubr.bf16.gmra.mrb[0].mxu0 %v2275
        %v2836 = vpop.f32.mrb[0].mxu0
        %v2837 = vadd.f32 %v2724, %v2836
        %v2838 = vpop.f32.mrb[0].mxu0
        %v2839 = vadd.f32 %v2726, %v2838
        %v2840 = vpop.f32.mrb[0].mxu0
        %v2841 = vadd.f32 %v2728, %v2840
        %v2842 = vpop.f32.mrb[0].mxu0
        %v2843 = vadd.f32 %v2730, %v2842
        %2844 = vmatprep.mubr.bf16.mxu0 %v2280
        %2845 = vmatmul.mubr.bf16.gmra.mrb[0].mxu0 %v2279
        %v2846 = vpop.f32.mrb[0].mxu0
        %v2847 = vadd.f32 %v2734, %v2846
        %v2848 = vpop.f32.mrb[0].mxu0
        %v2849 = vadd.f32 %v2736, %v2848
        %v2850 = vpop.f32.mrb[0].mxu0
        %v2851 = vadd.f32 %v2738, %v2850
        %v2852 = vpop.f32.mrb[0].mxu0
        %v2853 = vadd.f32 %v2740, %v2852
        %2854 = vmatprep.mubr.bf16.mxu0 %v2284
        %2855 = vmatmul.mubr.bf16.gmra.mrb[0].mxu0 %v2283
        %v2856 = vpop.f32.mrb[0].mxu0
        %v2857 = vadd.f32 %v2744, %v2856
        %v2858 = vpop.f32.mrb[0].mxu0
        %v2859 = vadd.f32 %v2746, %v2858
        %v2860 = vpop.f32.mrb[0].mxu0
        %v2861 = vadd.f32 %v2748, %v2860
        %v2862 = vpop.f32.mrb[0].mxu0
        %v2863 = vadd.f32 %v2750, %v2862
        %2864 = vmatprep.mubr.bf16.mxu0 %v2288
        %2865 = vmatmul.mubr.bf16.gmra.mrb[0].mxu0 %v2287
        %v2866 = vpop.f32.mrb[0].mxu0
        %v2867 = vadd.f32 %v2754, %v2866
        %v2868 = vpop.f32.mrb[0].mxu0
        %v2869 = vadd.f32 %v2756, %v2868
        %v2870 = vpop.f32.mrb[0].mxu0
        %v2871 = vadd.f32 %v2758, %v2870
        %v2872 = vpop.f32.mrb[0].mxu0
        %v2873 = vadd.f32 %v2760, %v2872
        %2874 = vmatprep.mubr.bf16.mxu0 %v2292
        %2875 = vmatmul.mubr.bf16.gmra.mrb[0].mxu0 %v2291
        %v2876 = vpop.f32.mrb[0].mxu0
        %v2877 = vadd.f32 %v2764, %v2876
        %v2878 = vpop.f32.mrb[0].mxu0
        %v2879 = vadd.f32 %v2766, %v2878
        %v2880 = vpop.f32.mrb[0].mxu0
        %v2881 = vadd.f32 %v2768, %v2880
        %v2882 = vpop.f32.mrb[0].mxu0
        %v2883 = vadd.f32 %v2770, %v2882
        %2884 = vmatprep.mubr.bf16.mxu0 %v2296
        %2885 = vmatmul.mubr.bf16.gmra.mrb[0].mxu0 %v2295
        %v2886 = vpop.f32.mrb[0].mxu0
        %v2887 = vadd.f32 %v2774, %v2886
        %v2888 = vpop.f32.mrb[0].mxu0
        %v2889 = vadd.f32 %v2776, %v2888
        %v2890 = vpop.f32.mrb[0].mxu0
        %v2891 = vadd.f32 %v2778, %v2890
        %v2892 = vpop.f32.mrb[0].mxu0
        %v2893 = vadd.f32 %v2780, %v2892
        %2894 = vmatprep.mubr.bf16.mxu0 %v2300
        %2895 = vmatmul.mubr.bf16.gmra.mrb[0].mxu0 %v2299
        %v2896 = vpop.f32.mrb[0].mxu0
        %v2897 = vadd.f32 %v2784, %v2896
        %v2898 = vpop.f32.mrb[0].mxu0
        %v2899 = vadd.f32 %v2786, %v2898
        %v2900 = vpop.f32.mrb[0].mxu0
        %v2901 = vadd.f32 %v2788, %v2900
        %v2902 = vpop.f32.mrb[0].mxu0
        %v2903 = vadd.f32 %v2790, %v2902
        %2904 = vmatprep.mubr.bf16.mxu0 %v2304
        %2905 = vmatmul.mubr.bf16.gmra.mrb[0].mxu0 %v2303
        %v2906 = vpop.f32.mrb[0].mxu0
        %v2907 = vadd.f32 %v2794, %v2906
        %v2908 = vpop.f32.mrb[0].mxu0
        %v2909 = vadd.f32 %v2796, %v2908
        %v2910 = vpop.f32.mrb[0].mxu0
        %v2911 = vadd.f32 %v2798, %v2910
        %v2912 = vpop.f32.mrb[0].mxu0
        %v2913 = vadd.f32 %v2800, %v2912
        %2914 = vdwg.mxu0
        %v2915 = vadd.f32 %v285, %v2837
        %v2916 = vadd.f32 %v286, %v2839
        %v2917 = vadd.f32 %v287, %v2841
        %v2918 = vadd.f32 %v288, %v2843
        %v2919 = vadd.f32 %v289, %v2847
        %v2920 = vadd.f32 %v290, %v2849
        %v2921 = vadd.f32 %v291, %v2851
        %v2922 = vadd.f32 %v292, %v2853
        %v2923 = vadd.f32 %v293, %v2857
        %v2924 = vadd.f32 %v294, %v2859
        %v2925 = vadd.f32 %v295, %v2861
        %v2926 = vadd.f32 %v296, %v2863
        %v2927 = vadd.f32 %v297, %v2867
        %v2928 = vadd.f32 %v298, %v2869
        %v2929 = vadd.f32 %v299, %v2871
        %v2930 = vadd.f32 %v300, %v2873
        %v2931 = vadd.f32 %v301, %v2877
        %v2932 = vadd.f32 %v302, %v2879
        %v2933 = vadd.f32 %v303, %v2881
        %v2934 = vadd.f32 %v304, %v2883
        %v2935 = vadd.f32 %v305, %v2887
        %v2936 = vadd.f32 %v306, %v2889
        %v2937 = vadd.f32 %v307, %v2891
        %v2938 = vadd.f32 %v308, %v2893
        %v2939 = vadd.f32 %v309, %v2897
        %v2940 = vadd.f32 %v310, %v2899
        %v2941 = vadd.f32 %v311, %v2901
        %v2942 = vadd.f32 %v312, %v2903
        %v2943 = vadd.f32 %v313, %v2907
        %v2944 = vadd.f32 %v314, %v2909
        %v2945 = vadd.f32 %v315, %v2911
        %v2946 = vadd.f32 %v316, %v2913
        %2947 = vst [vmem:[%s246] sm:$0xff] %v2915
        %2948 = vst [vmem:[%s246 + $0x8] sm:$0xff] %v2916
        %2949 = vst [vmem:[%s246 + $0x10] sm:$0xff] %v2917
        %2950 = vst [vmem:[%s246 + $0x18] sm:$0xff] %v2918
        %2951 = vst [vmem:[%s246 + $0x20] sm:$0xff] %v2919
        %2952 = vst [vmem:[%s246 + $0x28] sm:$0xff] %v2920
        %2953 = vst [vmem:[%s246 + $0x30] sm:$0xff] %v2921
        %2954 = vst [vmem:[%s246 + $0x38] sm:$0xff] %v2922
        %2955 = vst [vmem:[%s246 + $0x40] sm:$0xff] %v2923
        %2956 = vst [vmem:[%s246 + $0x48] sm:$0xff] %v2924
        %2957 = vst [vmem:[%s246 + $0x50] sm:$0xff] %v2925
        %2958 = vst [vmem:[%s246 + $0x58] sm:$0xff] %v2926
        %2959 = vst [vmem:[%s246 + $0x60] sm:$0xff] %v2927
        %2960 = vst [vmem:[%s246 + $0x68] sm:$0xff] %v2928
        %2961 = vst [vmem:[%s246 + $0x70] sm:$0xff] %v2929
        %2962 = vst [vmem:[%s246 + $0x78] sm:$0xff] %v2930
        %2963 = vst [vmem:[%s246 + $0x80] sm:$0xff] %v2931
        %2964 = vst [vmem:[%s246 + $0x88] sm:$0xff] %v2932
        %2965 = vst [vmem:[%s246 + $0x90] sm:$0xff] %v2933
        %2966 = vst [vmem:[%s246 + $0x98] sm:$0xff] %v2934
        %2967 = vst [vmem:[%s246 + $0xa0] sm:$0xff] %v2935
        %2968 = vst [vmem:[%s246 + $0xa8] sm:$0xff] %v2936
        %2969 = vst [vmem:[%s246 + $0xb0] sm:$0xff] %v2937
        %2970 = vst [vmem:[%s246 + $0xb8] sm:$0xff] %v2938
        %2971 = vst [vmem:[%s246 + $0xc0] sm:$0xff] %v2939
        %2972 = vst [vmem:[%s246 + $0xc8] sm:$0xff] %v2940
        %2973 = vst [vmem:[%s246 + $0xd0] sm:$0xff] %v2941
        %2974 = vst [vmem:[%s246 + $0xd8] sm:$0xff] %v2942
        %2975 = vst [vmem:[%s246 + $0xe0] sm:$0xff] %v2943
        %2976 = vst [vmem:[%s246 + $0xe8] sm:$0xff] %v2944
        %2977 = vst [vmem:[%s246 + $0xf0] sm:$0xff] %v2945
        %2978 = vst [vmem:[%s246 + $0xf8] sm:$0xff] %v2946
        %s2979 = sand.u32 %s119, 1
        %s2980 = scalar_lea.sflag [#allocation4], %s2979
        %s2981 = sand.u32 %s119, 1
        %s2982 = smul.addr %s2981, 256
        %s2983 = scalar_lea.vmem [#allocation8], %s2982
        // Predicated region
        $region49: #{_gemma_mlp_pallas.1} parent=31 // pred_check
          %p2984 = pneg %p129
        $region50: #{_gemma_mlp_pallas.1} parent=31 // pred_check_branch
          %2986 = sbr.rel (%p2984) target = $region52
        $region51: #{_gemma_mlp_pallas.1} parent=31 // pred_region
          %s2987 = smul.u32 16, %s25
          %s2989 = ssub.s32 4096, 4096
          %2990 = vsyncadd %s2980, %s2989
          %s2991 = smul.addr %s2987, 2
          %s2992 = smul.addr %s2991, 128
          %s2993 = scalar_lea.hbm %s3, %s2992
          %s2994 = sshll.u32 %s2983, 4
          %s2995 = int_to_ptr.vmem [resolvable:$true] %s2994
          %3000 = dma.vmem_to_hbm [thread:$0]  %s2995, 4096, %s2993, %s2980, 256, 256, 16
        $region52: #{_gemma_mlp_pallas.1} parent=31 // pred_fallthru
          _
      $region32: #{_gemma_mlp_pallas.1} parent=5 // pred_fallthru
        _
      %p3001 = scmp.le.s32.totalorder 2, %s16
      // Predicated region
      $region53: #{_gemma_mlp_pallas.1} parent=5 // pred_check
        %p3002 = pneg %p3001
      $region54: #{_gemma_mlp_pallas.1} parent=5 // pred_check_branch
        %3004 = sbr.rel (%p3002) target = $region56
      $region55: #{_gemma_mlp_pallas.1} parent=5 // pred_region
        %s3005 = ssub.s32 %s16, 2
        // Predicated region
        $region57: #{_gemma_mlp_pallas.1} parent=55 // pred_check
          %p3006 = pneg %p135
        $region58: #{_gemma_mlp_pallas.1} parent=55 // pred_check_branch
          %3008 = sbr.rel (%p3006) target = $region60
        $region59: #{_gemma_mlp_pallas.1} parent=55 // pred_region
          %s3009 = sand.u32 %s120, 1
          %s3010 = scalar_lea.sflag [#allocation4], %s3009
          %s3011 = sand.u32 %s120, 1
          %s3012 = smul.addr %s3011, 256
          %s3013 = scalar_lea.vmem [#allocation8], %s3012
          %3014 = dma.done %s3010, 4096
        $region60: #{_gemma_mlp_pallas.1} parent=55 // pred_fallthru
          _
      $region56: #{_gemma_mlp_pallas.1} parent=5 // pred_fallthru
        _
    $region6: #{_gemma_mlp_pallas.1} parent=1 // loop_footer
      %s20 = sadd.s32 1, %s16
    $region7: #{_gemma_mlp_pallas.1} parent=1 // loop_footer_branch
      %15 = sbr.rel target = $region3
    $region8: #{_gemma_mlp_pallas.1} parent=1 // loop_exit
      _
    %3015 = vsyncpa [#allocation3], 1
    %s3016 = scalar_lea.sflag [#allocation3], 1
    %3017 = vsyncpa %s3016, 1
    %3018 = vsyncpa [#allocation6], 1
    %3019 = vsyncpa [#allocation4], 1
    %s3020 = scalar_lea.sflag [#allocation4], 1
    %3021 = vsyncpa %s3020, 1

</llo_original>
